<compile_context>
chip_gen: v6e
topology: v6e:2x2x1
jax: 0.10.0
libtpu: 0.0.40
codegen_flags: <defaults>
</compile_context>

<pallas_src>
import functools

import jax
import jax.numpy as jnp
from jax.experimental import pallas as pl
from jax.experimental.pallas import tpu as pltpu


def _round_up(a, b):
    return (a + b - 1) // b * b


def _model_kernel(x_ref, stem_w_ref, stem_b_ref, fc_w_ref, fc_b_ref,
                  o_ref, acc_ref, *, hw_true, hw_tile, chunk, needs_mask):
    # x_ref:      (hw_tile, C_PAD)  spatial-major tile of one sample
    # stem_w_ref: (C_PAD, hidden)   zero-padded 1x1-conv stem weights
    # stem_b_ref: (1, hidden)       stem bias
    # fc_w_ref:   (hidden, OUT_PAD) fc weights, pre-scaled by 1/HW, lane-padded
    # fc_b_ref:   (1, OUT_PAD)      fc bias, lane-padded
    # o_ref:      (1, OUT_PAD)      per-sample output row (resident across j)
    # acc_ref:    (8, hidden) f32   per-sublane partial spatial sums
    j = pl.program_id(1)

    @pl.when(j == 0)
    def _init():
        acc_ref[...] = jnp.zeros_like(acc_ref)

    w = stem_w_ref[...]                              # (C_PAD, hidden)
    b = stem_b_ref[...]                              # (1, hidden)
    hidden = w.shape[1]
    n_chunks = hw_tile // chunk

    def body(c, carry):
        start = pl.multiple_of(c * chunk, chunk)
        xc = x_ref[pl.ds(start, chunk), :]           # (chunk, C_PAD)
        # Stem 1x1 conv on the MXU (K = C_PAD, padded/masked by the compiler).
        hc = jnp.dot(xc, w, preferred_element_type=jnp.float32) + b
        hc = jnp.maximum(hc, 0.0)                    # ReLU (VPU)
        if needs_mask:
            # Zero out spatial rows past the true H*W (they would otherwise
            # contribute relu(bias) to the global-average-pool sum).
            row = (j * hw_tile + start
                   + jax.lax.broadcasted_iota(jnp.int32, (chunk, 1), 0))
            hc = jnp.where(row < hw_true, hc, 0.0)
        # Partial global-average-pool: elementwise adds into the (8, hidden)
        # partial-sum scratch (no per-chunk cross-lane/sublane XLU reduce).
        acc_ref[...] += jnp.sum(hc.reshape(chunk // 8, 8, hidden), axis=0)
        return carry

    jax.lax.fori_loop(0, n_chunks, body, 0, unroll=True)

    # Finalize on the last spatial tile: reduce sublanes once, then fc head
    # (the 1/HW pooling scale is already folded into fc_w).
    @pl.when(j == pl.num_programs(1) - 1)
    def _finalize():
        feat = jnp.sum(acc_ref[...], axis=0, keepdims=True)          # (1, hidden)
        out = jnp.dot(feat, fc_w_ref[...],
                      preferred_element_type=jnp.float32) + fc_b_ref[...]
        o_ref[...] = out.astype(o_ref.dtype)


def model_forward(x_nchw, stem_w, stem_b, fc_w, fc_b, *, hw_tile=None, chunk=256):
    """x_nchw: (N, C_in, H, W) float32.  Returns (N, output_shape) float32."""
    N, C_in, H, W = x_nchw.shape
    HW = H * W
    hidden = stem_w.shape[1]
    out_dim = fc_w.shape[1]

    c_pad = _round_up(C_in, 8)
    out_pad = _round_up(out_dim, 128)

    # Spatial tile selection: chunk-aligned, capped so the per-step working set
    # stays ~1-2 MiB (fits v5e 16 MiB scoped / v7x 64 MiB VMEM comfortably).
    if hw_tile is None:
        hw_tile = min(2048, _round_up(HW, chunk))
    hw_tile = _round_up(hw_tile, chunk)
    hw_pad = _round_up(HW, hw_tile)
    needs_mask = (hw_pad != HW)

    # Native NCHW -> spatial-major (N, HW, C).  One wrapper transpose; the
    # kernel is strongly compute-bound, so this extra HBM pass is negligible.
    x = jnp.transpose(x_nchw.astype(jnp.float32), (0, 2, 3, 1)).reshape(N, HW, C_in)
    x = jnp.pad(x, ((0, 0), (0, hw_pad - HW), (0, c_pad - C_in)))

    # One-time weight transforms (constant folds on weights, not input scaling).
    stem_w_pad = jnp.zeros((c_pad, hidden), jnp.float32).at[:C_in, :].set(
        jnp.asarray(stem_w, jnp.float32))
    stem_b_row = jnp.asarray(stem_b, jnp.float32).reshape(1, hidden)
    fc_w_pad = jnp.zeros((hidden, out_pad), jnp.float32).at[:, :out_dim].set(
        jnp.asarray(fc_w, jnp.float32) / jnp.float32(HW))    # fold 1/HW pool
    fc_b_pad = jnp.zeros((1, out_pad), jnp.float32).at[:, :out_dim].set(
        jnp.asarray(fc_b, jnp.float32))

    grid = (N, hw_pad // hw_tile)

    kernel = functools.partial(_model_kernel, hw_true=HW, hw_tile=hw_tile,
                               chunk=chunk, needs_mask=needs_mask)

    out_padded = pl.pallas_call(
        kernel,
        out_shape=jax.ShapeDtypeStruct((N, 1, out_pad), jnp.float32),
        grid_spec=pltpu.PrefetchScalarGridSpec(
            num_scalar_prefetch=0,
            grid=grid,
            in_specs=[
                pl.BlockSpec((None, hw_tile, c_pad), lambda i, j: (i, j, 0)),
                pl.BlockSpec((c_pad, hidden), lambda i, j: (0, 0)),
                pl.BlockSpec((1, hidden), lambda i, j: (0, 0)),
                pl.BlockSpec((hidden, out_pad), lambda i, j: (0, 0)),
                pl.BlockSpec((1, out_pad), lambda i, j: (0, 0)),
            ],
            out_specs=pl.BlockSpec((None, 1, out_pad), lambda i, j: (i, 0, 0)),
            scratch_shapes=[pltpu.VMEM((8, hidden), jnp.float32)],
        ),
        compiler_params=pltpu.CompilerParams(
            dimension_semantics=("parallel", "arbitrary")),
    )(x, stem_w_pad, stem_b_row, fc_w_pad, fc_b_pad)

    # Slice the lane-padded output back to the real head width.
    return out_padded.reshape(N, out_pad)[:, :out_dim]


def _ref_forward(x_nchw, stem_w, stem_b, fc_w, fc_b):
    N, C_in, H, W = x_nchw.shape
    x = jnp.transpose(x_nchw, (0, 2, 3, 1)).reshape(N, H * W, C_in)
    h = jnp.maximum(jnp.einsum("npc,ch->nph", x, stem_w) + stem_b, 0.0)
    feat = jnp.mean(h, axis=1)
    return feat @ fc_w + fc_b


def _make_params(key, c_in, hidden, output_shape):
    k_sw, k_sb, k_fw, k_fb = jax.random.split(key, 4)
    stem_bound = 1.0 / jnp.sqrt(jnp.float32(c_in))
    stem_w = jax.random.uniform(k_sw, (c_in, hidden), jnp.float32,
                                -stem_bound, stem_bound)
    stem_b = jax.random.uniform(k_sb, (hidden,), jnp.float32,
                                -stem_bound, stem_bound)
    fc_bound = 1.0 / jnp.sqrt(jnp.float32(hidden))
    fc_w = jax.random.uniform(k_fw, (hidden, output_shape), jnp.float32,
                              -fc_bound, fc_bound)
    fc_b = jax.random.uniform(k_fb, (output_shape,), jnp.float32,
                              -fc_bound, fc_bound)
    return stem_w, stem_b, fc_w, fc_b


def _run_case(key, n, c_in, h, w, hidden, output_shape, tol):
    k_x, k_p = jax.random.split(key)
    x = jax.random.normal(k_x, (n, c_in, h, w), dtype=jnp.float32)
    stem_w, stem_b, fc_w, fc_b = _make_params(k_p, c_in, hidden, output_shape)

    out = model_forward(x, stem_w, stem_b, fc_w, fc_b)
    out = jax.block_until_ready(out)

    ref = _ref_forward(x, stem_w, stem_b, fc_w, fc_b)
    assert out.shape == (n, output_shape), out.shape
    assert jnp.allclose(out, ref, atol=tol, rtol=tol), (
        float(jnp.max(jnp.abs(out - ref))))


if __name__ == "__main__":
    key = jax.random.PRNGKey(0)
    k1, k2 = jax.random.split(key)

    # Small shapes consistent with the module: RGB image input, 512-d features,
    # last_linear = Linear(512, output_shape).
    _run_case(k1, n=2, c_in=3, h=16, w=16, hidden=512, output_shape=10,
              tol=1e-4)

    # Exercise the masked/padded paths: HW not a multiple of the spatial tile
    # (multi-tile reduction with a ragged last tile) and batch not a multiple
    # of 8.
    _run_case(k2, n=3, c_in=3, h=48, w=48, hidden=512, output_shape=7,
              tol=2e-3)

    print("KERNEL_OK")
</pallas_src>

<mosaic_0001>
module attributes {stable_mosaic.version = 11 : i64} {
  func.func @_model_kernel(%arg0: i32, %arg1: i32, %arg2: memref<1x256x8xf32, #tpu.memory_space<vmem>>, %arg3: memref<8x512xf32, #tpu.memory_space<vmem>>, %arg4: memref<1x512xf32, #tpu.memory_space<vmem>>, %arg5: memref<512x128xf32, #tpu.memory_space<vmem>>, %arg6: memref<1x128xf32, #tpu.memory_space<vmem>>, %arg7: memref<1x1x128xf32, #tpu.memory_space<vmem>>, %arg8: memref<8x512xf32, #tpu.memory_space<vmem>>) attributes {dimension_semantics = [#tpu.dimension_semantics<parallel>, #tpu.dimension_semantics<arbitrary>], iteration_bounds = array<i64: 2, 1>, scalar_prefetch = 0 : i64, scratch_operands = 1 : i64, tpu.core_type = #tpu.core_type<tc>, window_params = [{transform_indices = @transform_0, window_bounds = array<i64: 1, 256, 8>}, {pipeline_mode = #tpu.pipeline_mode<synchronous>, transform_indices = @transform_1, window_bounds = array<i64: 8, 512>}, {pipeline_mode = #tpu.pipeline_mode<synchronous>, transform_indices = @transform_2, window_bounds = array<i64: 1, 512>}, {pipeline_mode = #tpu.pipeline_mode<synchronous>, transform_indices = @transform_3, window_bounds = array<i64: 512, 128>}, {pipeline_mode = #tpu.pipeline_mode<synchronous>, transform_indices = @transform_4, window_bounds = array<i64: 1, 128>}, {transform_indices = @transform_5, window_bounds = array<i64: 1, 1, 128>}]} {
    %c0_i32 = arith.constant 0 : i32
    %0 = arith.cmpi eq, %arg1, %c0_i32 : i32
    %1 = arith.extui %0 : i1 to i32
    %c0_i32_0 = arith.constant 0 : i32
    %2 = arith.cmpi ne, %1, %c0_i32_0 : i32
    scf.if %2 {
      %cst_15 = arith.constant 0.000000e+00 : f32
      %23 = vector.broadcast %cst_15 : f32 to vector<8x512xf32>
      %c0_16 = arith.constant 0 : index
      %c0_17 = arith.constant 0 : index
      %24 = vector.load %arg8[%c0_16, %c0_17] : memref<8x512xf32, #tpu.memory_space<vmem>>, vector<8x512xf32>
      tpu.vector_store %arg8[%c0_16, %c0_17], %23 {strides = array<i32>} : memref<8x512xf32, #tpu.memory_space<vmem>>, vector<8x512xf32>,
    } else {
    }
    %c0 = arith.constant 0 : index
    %c0_1 = arith.constant 0 : index
    %3 = vector.load %arg3[%c0, %c0_1] : memref<8x512xf32, #tpu.memory_space<vmem>>, vector<8x512xf32>
    %c0_2 = arith.constant 0 : index
    %c0_3 = arith.constant 0 : index
    %4 = vector.load %arg4[%c0_2, %c0_3] : memref<1x512xf32, #tpu.memory_space<vmem>>, vector<1x512xf32>
    %c0_i32_4 = arith.constant 0 : i32
    %c256_i32 = arith.constant 256 : i32
    %5 = arith.muli %c0_i32_4, %c256_i32 : i32
    %6 = tpu.assume_multiple %5, 256 : i32
    %c0_5 = arith.constant 0 : index
    %7 = arith.index_cast %6 : i32 to index
    %c0_6 = arith.constant 0 : index
    %8 = vector.load %arg2[%c0_5, %7, %c0_6] : memref<1x256x8xf32, #tpu.memory_space<vmem>>, vector<1x256x8xf32>
    %9 = vector.shape_cast %8 : vector<1x256x8xf32> to vector<256x8xf32>
    %cst = arith.constant dense<0.000000e+00> : vector<256x512xf32>
    %10 = tpu.matmul %9, %3, %cst {dimension_numbers = #tpu.dot_dimension_numbers<[1], [0], [0], [1], [0, 0, 1, 1], [], []>} : vector<256x8xf32>, vector<8x512xf32>, vector<256x512xf32> -> vector<256x512xf32>
    %11 = vector.broadcast %4 : vector<1x512xf32> to vector<256x512xf32>
    %12 = arith.addf %10, %11 : vector<256x512xf32>
    %cst_7 = arith.constant 0.000000e+00 : f32
    %13 = vector.broadcast %cst_7 : f32 to vector<256x512xf32>
    %14 = arith.maximumf %12, %13 : vector<256x512xf32>
    %c0_8 = arith.constant 0 : index
    %c0_9 = arith.constant 0 : index
    %15 = vector.load %arg8[%c0_8, %c0_9] : memref<8x512xf32, #tpu.memory_space<vmem>>, vector<8x512xf32>
    %16 = vector.shape_cast %14 : vector<256x512xf32> to vector<32x8x512xf32>
    %cst_10 = arith.constant dense<0.000000e+00> : vector<8x512xf32>
    %17 = vector.multi_reduction <add>, %16, %cst_10 [0] : vector<32x8x512xf32> to vector<8x512xf32>
    %18 = arith.addf %15, %17 : vector<8x512xf32>
    %c0_11 = arith.constant 0 : index
    %c0_12 = arith.constant 0 : index
    %19 = vector.load %arg8[%c0_11, %c0_12] : memref<8x512xf32, #tpu.memory_space<vmem>>, vector<8x512xf32>
    tpu.vector_store %arg8[%c0_11, %c0_12], %18 {strides = array<i32>} : memref<8x512xf32, #tpu.memory_space<vmem>>, vector<8x512xf32>,
    %c1_i32 = arith.constant 1 : i32
    %c0_i32_13 = arith.constant 0 : i32
    %20 = arith.cmpi eq, %arg1, %c0_i32_13 : i32
    %21 = arith.extui %20 : i1 to i32
    %c0_i32_14 = arith.constant 0 : i32
    %22 = arith.cmpi ne, %21, %c0_i32_14 : i32
    scf.if %22 {
      %c0_15 = arith.constant 0 : index
      %c0_16 = arith.constant 0 : index
      %23 = vector.load %arg8[%c0_15, %c0_16] : memref<8x512xf32, #tpu.memory_space<vmem>>, vector<8x512xf32>
      %cst_17 = arith.constant dense<0.000000e+00> : vector<512xf32>
      %24 = vector.multi_reduction <add>, %23, %cst_17 [0] : vector<8x512xf32> to vector<512xf32>
      %25 = vector.shape_cast %24 : vector<512xf32> to vector<1x512xf32>
      %c0_18 = arith.constant 0 : index
      %c0_19 = arith.constant 0 : index
      %26 = vector.load %arg5[%c0_18, %c0_19] : memref<512x128xf32, #tpu.memory_space<vmem>>, vector<512x128xf32>
      %cst_20 = arith.constant dense<0.000000e+00> : vector<1x128xf32>
      %27 = tpu.matmul %25, %26, %cst_20 {dimension_numbers = #tpu.dot_dimension_numbers<[1], [0], [0], [1], [0, 0, 1, 1], [], []>} : vector<1x512xf32>, vector<512x128xf32>, vector<1x128xf32> -> vector<1x128xf32>
      %c0_21 = arith.constant 0 : index
      %c0_22 = arith.constant 0 : index
      %28 = vector.load %arg6[%c0_21, %c0_22] : memref<1x128xf32, #tpu.memory_space<vmem>>, vector<1x128xf32>
      %29 = arith.addf %27, %28 : vector<1x128xf32>
      %c0_23 = arith.constant 0 : index
      %c0_24 = arith.constant 0 : index
      %c0_25 = arith.constant 0 : index
      %30 = vector.load %arg7[%c0_23, %c0_24, %c0_25] : memref<1x1x128xf32, #tpu.memory_space<vmem>>, vector<1x1x128xf32>
      %31 = vector.shape_cast %30 : vector<1x1x128xf32> to vector<1x128xf32>
      %32 = vector.shape_cast %29 : vector<1x128xf32> to vector<1x1x128xf32>
      tpu.vector_store %arg7[%c0_23, %c0_24, %c0_25], %32 {strides = array<i32>} : memref<1x1x128xf32, #tpu.memory_space<vmem>>, vector<1x1x128xf32>,
    } else {
    }
    return
  }
  func.func @transform_0(%arg0: i32, %arg1: i32) -> (i32, i32, i32) {
    %c0_i32 = arith.constant 0 : i32
    %c0_i32_0 = arith.constant 0 : i32
    return %arg0, %arg1, %c0_i32 : i32, i32, i32
  }
  func.func @transform_1(%arg0: i32, %arg1: i32) -> (i32, i32) {
    %c0_i32 = arith.constant 0 : i32
    %c0_i32_0 = arith.constant 0 : i32
    %c0_i32_1 = arith.constant 0 : i32
    return %c0_i32, %c0_i32_0 : i32, i32
  }
  func.func @transform_2(%arg0: i32, %arg1: i32) -> (i32, i32) {
    %c0_i32 = arith.constant 0 : i32
    %c0_i32_0 = arith.constant 0 : i32
    %c0_i32_1 = arith.constant 0 : i32
    return %c0_i32, %c0_i32_0 : i32, i32
  }
  func.func @transform_3(%arg0: i32, %arg1: i32) -> (i32, i32) {
    %c0_i32 = arith.constant 0 : i32
    %c0_i32_0 = arith.constant 0 : i32
    %c0_i32_1 = arith.constant 0 : i32
    return %c0_i32, %c0_i32_0 : i32, i32
  }
  func.func @transform_4(%arg0: i32, %arg1: i32) -> (i32, i32) {
    %c0_i32 = arith.constant 0 : i32
    %c0_i32_0 = arith.constant 0 : i32
    %c0_i32_1 = arith.constant 0 : i32
    return %c0_i32, %c0_i32_0 : i32, i32
  }
  func.func @transform_5(%arg0: i32, %arg1: i32) -> (i32, i32, i32) {
    %c0_i32 = arith.constant 0 : i32
    %c0_i32_0 = arith.constant 0 : i32
    %c0_i32_1 = arith.constant 0 : i32
    return %arg0, %c0_i32, %c0_i32_0 : i32, i32, i32
  }
}

</mosaic_0001>

<llo_original>
// kernel: tpu_custom_call.1
$region0: #{tpu_custom_call.1}
  #allocation0 [shape = 'u32[]', space=smem, size = 0x4, offset = 0x4, fixed_abs, tag = 'smem constant byte address 0x4 - core index']
  #allocation1 [shape = 'u32[144,128]{1,0:T(1,128)}', space=vmem, size = 0x12000, scoped, tag = 'internal scratch']
  #allocation2 [shape = 'f32[8,512]{1,0:T(8,128)}', space=vmem, size = 0x4000, scoped, tag = 'scratch operand']
  %s0 = inlined_call_operand.vmem [shape: f32[2,256,8], index: 0, kind: input, shape index: {}]
  %s1 = inlined_call_operand.vmem [shape: f32[8,512], index: 1, kind: input, shape index: {}]
  %s2 = inlined_call_operand.vmem [shape: f32[1,512], index: 2, kind: input, shape index: {}]
  %s3 = inlined_call_operand.vmem [shape: f32[512,128], index: 3, kind: input, shape index: {}]
  %s4 = inlined_call_operand.vmem [shape: f32[1,128], index: 4, kind: input, shape index: {}]
  %s5 = inlined_call_operand.hbm [shape: f32[2,1,128], index: 5, kind: output, shape index: {}]
  %s6 = sld [smem:[#allocation0]]
  $region61: #{tpu_custom_call.1} parent=0
    _
  %s8 = ssub.s32 1, %s6
  %s9 = scalar_select 0, %s8, %s6
  $region1: #{tpu_custom_call.1} parent=0
    #allocation3 [shape = 'u8[1024]{0}', space=vmem, size = 0x400, scoped, tag = 'output window, operand 0']
    #allocation4 [shape = 's32[2]{0}', space=sflag, size = 0x8, scoped, tag = 'scoped memory for tpu_custom_call.1']
    %10 = vsyncpa [#allocation4], 0
    %s11 = scalar_lea.sflag [#allocation4], 1
    %12 = vsyncpa %s11, 0
    loop: start=0, step=1, limit=4
    $region2: #{tpu_custom_call.1} parent=1 // loop_pre_header
      _
    $region3: #{tpu_custom_call.1} parent=1 // loop_header
      %s14 = sphi 0, %s18
      %p15 = scmp.ge.s32.totalorder %s14, 4
      %s21 = sphi 0, %s33
      %s22 = sphi 0, %s29
      %s23 = sphi 0, %s21
      %s24 = sphi 0, %s22
      %s25 = sphi 0, %s23
      %s26 = sphi 0, %s24
      %s38 = sphi 0, %s40
      %s41 = sphi 0, %s38
      %s42 = sphi 0, %s41
      %s58 = sphi 0, %s42
      %s62 = sphi 0, %s62
      %s64 = sphi 0, %s62
      %s65 = sphi 0, %s64
      %s79 = sphi 0, %s65
      %s83 = sphi 0, %s83
      %s85 = sphi 0, %s83
      %s86 = sphi 0, %s85
      %s100 = sphi 0, %s86
      %s104 = sphi 0, %s104
      %s106 = sphi 0, %s104
      %s107 = sphi 0, %s106
      %s121 = sphi 0, %s107
      %s125 = sphi 0, %s125
      %s127 = sphi 0, %s125
      %s128 = sphi 0, %s127
      %s142 = sphi 0, %s128
      %s148 = sphi 0, %s150
      %s151 = sphi 0, %s148
      %s152 = sphi 0, %s151
      %s168 = sphi 0, %s152
    $region4: #{tpu_custom_call.1} parent=1 // loop_header_branch
      %17 = sbr.rel (%p15) target = $region8
    $region5: #{tpu_custom_call.1} parent=1 // loop_body
      %s19 = ssub.s32 %s14, 1
      %s20 = ssub.s32 %s14, 2
      %s27 = sadd.s32 1, %s22
      %p28 = scmp.ge.s32.totalorder %s27, 1
      %s29 = scalar_select %p28, 0, %s27
      %s30 = sadd.s32 1, %s21
      %s31 = scalar_select %p28, %s30, %s21
      %p32 = scmp.ge.s32.totalorder %s31, 2
      %s33 = scalar_select %p32, 0, %s31
      %s34 = ssub.s32 %s21, %s33
      %s35 = ssub.s32 %s22, %s29
      %s36 = sor.u32 %s34, %s35
      %p37 = scmp.eq.s32.totalorder %s36, 0
      %s39 = sadd.s32 %s38, 1
      %s40 = scalar_select %p37, %s38, %s39
      %p43 = pneg %p37
      %p44 = scmp.eq.s32.totalorder %s14, 1
      %p45 = por %p43, %p44
      %p46 = scmp.ne.s32.totalorder %s38, %s41
      %p47 = scmp.eq.s32.totalorder %s14, 0
      %p48 = por %p46, %p47
      %p49 = scmp.ne.s32.totalorder %s38, %s41
      %p50 = scmp.eq.s32.totalorder %s19, 1
      %p51 = por %p49, %p50
      %p52 = scmp.ne.s32.totalorder %s41, %s42
      %p53 = scmp.eq.s32.totalorder %s19, 0
      %p54 = por %p52, %p53
      %p55 = scmp.ne.s32.totalorder %s41, %s42
      %p56 = scmp.eq.s32.totalorder %s20, 1
      %p57 = por %p55, %p56
      %p59 = scmp.ne.s32.totalorder %s42, %s58
      %p60 = scmp.eq.s32.totalorder %s20, 0
      %p61 = por %p59, %p60
      %s63 = sadd.s32 %s62, 1
      %p66 = scmp.eq.s32.totalorder %s14, 1
      %p67 = scmp.ne.s32.totalorder %s62, %s64
      %p68 = scmp.eq.s32.totalorder %s14, 0
      %p69 = por %p67, %p68
      %p70 = scmp.ne.s32.totalorder %s62, %s64
      %p71 = scmp.eq.s32.totalorder %s19, 1
      %p72 = por %p70, %p71
      %p73 = scmp.ne.s32.totalorder %s64, %s65
      %p74 = scmp.eq.s32.totalorder %s19, 0
      %p75 = por %p73, %p74
      %p76 = scmp.ne.s32.totalorder %s64, %s65
      %p77 = scmp.eq.s32.totalorder %s20, 1
      %p78 = por %p76, %p77
      %p80 = scmp.ne.s32.totalorder %s65, %s79
      %p81 = scmp.eq.s32.totalorder %s20, 0
      %p82 = por %p80, %p81
      %s84 = sadd.s32 %s83, 1
      %p87 = scmp.eq.s32.totalorder %s14, 1
      %p88 = scmp.ne.s32.totalorder %s83, %s85
      %p89 = scmp.eq.s32.totalorder %s14, 0
      %p90 = por %p88, %p89
      %p91 = scmp.ne.s32.totalorder %s83, %s85
      %p92 = scmp.eq.s32.totalorder %s19, 1
      %p93 = por %p91, %p92
      %p94 = scmp.ne.s32.totalorder %s85, %s86
      %p95 = scmp.eq.s32.totalorder %s19, 0
      %p96 = por %p94, %p95
      %p97 = scmp.ne.s32.totalorder %s85, %s86
      %p98 = scmp.eq.s32.totalorder %s20, 1
      %p99 = por %p97, %p98
      %p101 = scmp.ne.s32.totalorder %s86, %s100
      %p102 = scmp.eq.s32.totalorder %s20, 0
      %p103 = por %p101, %p102
      %s105 = sadd.s32 %s104, 1
      %p108 = scmp.eq.s32.totalorder %s14, 1
      %p109 = scmp.ne.s32.totalorder %s104, %s106
      %p110 = scmp.eq.s32.totalorder %s14, 0
      %p111 = por %p109, %p110
      %p112 = scmp.ne.s32.totalorder %s104, %s106
      %p113 = scmp.eq.s32.totalorder %s19, 1
      %p114 = por %p112, %p113
      %p115 = scmp.ne.s32.totalorder %s106, %s107
      %p116 = scmp.eq.s32.totalorder %s19, 0
      %p117 = por %p115, %p116
      %p118 = scmp.ne.s32.totalorder %s106, %s107
      %p119 = scmp.eq.s32.totalorder %s20, 1
      %p120 = por %p118, %p119
      %p122 = scmp.ne.s32.totalorder %s107, %s121
      %p123 = scmp.eq.s32.totalorder %s20, 0
      %p124 = por %p122, %p123
      %s126 = sadd.s32 %s125, 1
      %p129 = scmp.eq.s32.totalorder %s14, 1
      %p130 = scmp.ne.s32.totalorder %s125, %s127
      %p131 = scmp.eq.s32.totalorder %s14, 0
      %p132 = por %p130, %p131
      %p133 = scmp.ne.s32.totalorder %s125, %s127
      %p134 = scmp.eq.s32.totalorder %s19, 1
      %p135 = por %p133, %p134
      %p136 = scmp.ne.s32.totalorder %s127, %s128
      %p137 = scmp.eq.s32.totalorder %s19, 0
      %p138 = por %p136, %p137
      %p139 = scmp.ne.s32.totalorder %s127, %s128
      %p140 = scmp.eq.s32.totalorder %s20, 1
      %p141 = por %p139, %p140
      %p143 = scmp.ne.s32.totalorder %s128, %s142
      %p144 = scmp.eq.s32.totalorder %s20, 0
      %p145 = por %p143, %p144
      %s146 = ssub.s32 %s21, %s33
      %p147 = scmp.eq.s32.totalorder %s146, 0
      %s149 = sadd.s32 %s148, 1
      %s150 = scalar_select %p147, %s148, %s149
      %p153 = pneg %p147
      %p154 = scmp.eq.s32.totalorder %s14, 1
      %p155 = por %p153, %p154
      %p156 = scmp.ne.s32.totalorder %s148, %s151
      %p157 = scmp.eq.s32.totalorder %s14, 0
      %p158 = por %p156, %p157
      %p159 = scmp.ne.s32.totalorder %s148, %s151
      %p160 = scmp.eq.s32.totalorder %s19, 1
      %p161 = por %p159, %p160
      %p162 = scmp.ne.s32.totalorder %s151, %s152
      %p163 = scmp.eq.s32.totalorder %s19, 0
      %p164 = por %p162, %p163
      %p165 = scmp.ne.s32.totalorder %s151, %s152
      %p166 = scmp.eq.s32.totalorder %s20, 1
      %p167 = por %p165, %p166
      %p169 = scmp.ne.s32.totalorder %s152, %s168
      %p170 = scmp.eq.s32.totalorder %s20, 0
      %p171 = por %p169, %p170
      %p172 = scmp.le.s32.totalorder 1, %s14
      %p173 = scmp.lt.s32.totalorder %s14, 3
      %p174 = pnand %p172, %p173
      %p175 = pneg %p174
      // Predicated region
      $region9: #{tpu_custom_call.1} parent=5 // pred_check
        _
      $region10: #{tpu_custom_call.1} parent=5 // pred_check_branch
        %177 = sbr.rel (%p174) target = $region12
      $region11: #{tpu_custom_call.1} parent=5 // pred_region
        %s178 = ssub.s32 %s14, 1
        // Predicated region
        $region13: #{tpu_custom_call.1} parent=11 // pred_check
          %p179 = pneg %p75
        $region14: #{tpu_custom_call.1} parent=11 // pred_check_branch
          %181 = sbr.rel (%p179) target = $region16
        $region15: #{tpu_custom_call.1} parent=11 // pred_region
          _
        $region16: #{tpu_custom_call.1} parent=11 // pred_fallthru
          _
        // Predicated region
        $region17: #{tpu_custom_call.1} parent=11 // pred_check
          %p182 = pneg %p96
        $region18: #{tpu_custom_call.1} parent=11 // pred_check_branch
          %184 = sbr.rel (%p182) target = $region20
        $region19: #{tpu_custom_call.1} parent=11 // pred_region
          _
        $region20: #{tpu_custom_call.1} parent=11 // pred_fallthru
          _
        // Predicated region
        $region21: #{tpu_custom_call.1} parent=11 // pred_check
          %p185 = pneg %p117
        $region22: #{tpu_custom_call.1} parent=11 // pred_check_branch
          %187 = sbr.rel (%p185) target = $region24
        $region23: #{tpu_custom_call.1} parent=11 // pred_region
          _
        $region24: #{tpu_custom_call.1} parent=11 // pred_fallthru
          _
        // Predicated region
        $region25: #{tpu_custom_call.1} parent=11 // pred_check
          %p188 = pneg %p138
        $region26: #{tpu_custom_call.1} parent=11 // pred_check_branch
          %190 = sbr.rel (%p188) target = $region28
        $region27: #{tpu_custom_call.1} parent=11 // pred_region
          _
        $region28: #{tpu_custom_call.1} parent=11 // pred_fallthru
          _
      $region12: #{tpu_custom_call.1} parent=5 // pred_fallthru
        _
      %p191 = scmp.lt.s32.totalorder %s14, 2
      // Predicated region
      $region29: #{tpu_custom_call.1} parent=5 // pred_check
        %p192 = pneg %p191
      $region30: #{tpu_custom_call.1} parent=5 // pred_check_branch
        %194 = sbr.rel (%p192) target = $region32
      $region31: #{tpu_custom_call.1} parent=5 // pred_region
        // Predicated region
        $region33: #{tpu_custom_call.1} parent=31 // pred_check
          %p195 = pneg %p48
        $region34: #{tpu_custom_call.1} parent=31 // pred_check_branch
          %197 = sbr.rel (%p195) target = $region36
        $region35: #{tpu_custom_call.1} parent=31 // pred_region
          %s198 = smul.u32 32, %s22
          %p199 = scmp.lt.s32.totalorder %s21, 1
          %s200 = scalar_select %p199, %s21, 1
          %p201 = scmp.lt.s32.totalorder %s198, 31
          %s202 = scalar_select %p201, %s198, 31
          %s203 = smul.addr %s200, 32
          %s204 = sadd.s32 %s202, %s203
          %s205 = smul.addr %s204, 8
          %s206 = scalar_lea.vmem %s0, %s205
          %s207 = smul.u32 32, %s22
        $region36: #{tpu_custom_call.1} parent=31 // pred_fallthru
          _
      $region32: #{tpu_custom_call.1} parent=5 // pred_fallthru
        _
      %p208 = scmp.le.s32.totalorder 1, %s14
      %p209 = scmp.lt.s32.totalorder %s14, 3
      %p210 = pnand %p208, %p209
      %p211 = pneg %p210
      // Predicated region
      $region37: #{tpu_custom_call.1} parent=5 // pred_check
        _
      $region38: #{tpu_custom_call.1} parent=5 // pred_check_branch
        %213 = sbr.rel (%p210) target = $region40
      $region39: #{tpu_custom_call.1} parent=5 // pred_region
        %s214 = ssub.s32 %s14, 1
        %s215 = smul.u32 32, %s24
        %p216 = scmp.lt.s32.totalorder %s23, 1
        %s217 = scalar_select %p216, %s23, 1
        %p218 = scmp.lt.s32.totalorder %s215, 31
        %s219 = scalar_select %p218, %s215, 31
        %s220 = smul.addr %s217, 32
        %s221 = sadd.s32 %s219, %s220
        %s222 = smul.addr %s221, 8
        %s223 = scalar_lea.vmem %s0, %s222
        %p224 = pneg %p54
        %p225 = pneg %p51
        %p226 = pneg %p75
        %p227 = pneg %p72
        %p228 = pneg %p96
        %p229 = pneg %p93
        %p230 = pneg %p117
        %p231 = pneg %p114
        %p232 = pneg %p138
        %p233 = pneg %p135
        %p234 = pneg %p164
        %p235 = pneg %p161
        %s236 = sand.u32 %s151, 1
        %s237 = scalar_lea.sflag [#allocation4], %s236
        %s238 = sand.u32 %s151, 1
        %s239 = scalar_lea.vmem [#allocation3], %s238
        %s240 = smul.u32 32, %s24
        %p241 = scmp.lt.s32.totalorder %s23, 1
        %s242 = scalar_select %p241, %s23, 1
        %p243 = scmp.lt.s32.totalorder %s240, 31
        %s244 = scalar_select %p243, %s240, 31
        %s245 = smul.addr %s242, 32
        %s246 = sadd.s32 %s244, %s245
        %s247 = smul.addr %s246, 8
        %s248 = scalar_lea.vmem %s0, %s247
        %s249 = smul.u32 32, %s24
        %p250 = scmp.eq.s32.totalorder %s24, 0
        // Predicated region
        $region41: #{tpu_custom_call.1} parent=39 // pred_check
          %p251 = pneg %p250
        $region42: #{tpu_custom_call.1} parent=39 // pred_check_branch
          %253 = sbr.rel (%p251) target = $region44
        $region43: #{tpu_custom_call.1} parent=39 // pred_region
          %254 = vst [vmem:[#allocation2] sm:$0xff] 0.0
          %255 = vst [vmem:[#allocation2 + $0x8] sm:$0xff] 0.0
          %256 = vst [vmem:[#allocation2 + $0x10] sm:$0xff] 0.0
          %257 = vst [vmem:[#allocation2 + $0x18] sm:$0xff] 0.0
        $region44: #{tpu_custom_call.1} parent=39 // pred_fallthru
          _
        %v258 = vld [vmem:[%s1] sm:$0xff]
        %v259 = vld [vmem:[%s1 + $0x8] sm:$0xff]
        %v260 = vld [vmem:[%s1 + $0x10] sm:$0xff]
        %v261 = vld [vmem:[%s1 + $0x18] sm:$0xff]
        %v262 = vld [vmem:[%s2] sm:$0xf]
        %v263 = vld [vmem:[%s248] sm:$0xff]
        %v264 = vld [vmem:[%s248 + $0x8] sm:$0xff]
        %v265 = vld [vmem:[%s248 + $0x10] sm:$0xff]
        %v266 = vld [vmem:[%s248 + $0x18] sm:$0xff]
        %v267 = vld [vmem:[%s248 + $0x20] sm:$0xff]
        %v268 = vld [vmem:[%s248 + $0x28] sm:$0xff]
        %v269 = vld [vmem:[%s248 + $0x30] sm:$0xff]
        %v270 = vld [vmem:[%s248 + $0x38] sm:$0xff]
        %v271 = vld [vmem:[%s248 + $0x40] sm:$0xff]
        %v272 = vld [vmem:[%s248 + $0x48] sm:$0xff]
        %v273 = vld [vmem:[%s248 + $0x50] sm:$0xff]
        %v274 = vld [vmem:[%s248 + $0x58] sm:$0xff]
        %v275 = vld [vmem:[%s248 + $0x60] sm:$0xff]
        %v276 = vld [vmem:[%s248 + $0x68] sm:$0xff]
        %v277 = vld [vmem:[%s248 + $0x70] sm:$0xff]
        %v278 = vld [vmem:[%s248 + $0x78] sm:$0xff]
        %v279 = vld [vmem:[%s248 + $0x80] sm:$0xff]
        %v280 = vld [vmem:[%s248 + $0x88] sm:$0xff]
        %v281 = vld [vmem:[%s248 + $0x90] sm:$0xff]
        %v282 = vld [vmem:[%s248 + $0x98] sm:$0xff]
        %v283 = vld [vmem:[%s248 + $0xa0] sm:$0xff]
        %v284 = vld [vmem:[%s248 + $0xa8] sm:$0xff]
        %v285 = vld [vmem:[%s248 + $0xb0] sm:$0xff]
        %v286 = vld [vmem:[%s248 + $0xb8] sm:$0xff]
        %v287 = vld [vmem:[%s248 + $0xc0] sm:$0xff]
        %v288 = vld [vmem:[%s248 + $0xc8] sm:$0xff]
        %v289 = vld [vmem:[%s248 + $0xd0] sm:$0xff]
        %v290 = vld [vmem:[%s248 + $0xd8] sm:$0xff]
        %v291 = vld [vmem:[%s248 + $0xe0] sm:$0xff]
        %v292 = vld [vmem:[%s248 + $0xe8] sm:$0xff]
        %v293 = vld [vmem:[%s248 + $0xf0] sm:$0xff]
        %v294 = vld [vmem:[%s248 + $0xf8] sm:$0xff]
        %v296 = vlaneseq
        %v297 = vshrl.u32 %v296, 7
        %v298 = vsub.s32 0, %v297
        %v299 = vrot.slane %v262, %v298
        %v300 = vlaneseq
        %v301 = vshrl.u32 %v300, 7
        %v302 = vsub.s32 1, %v301
        %v303 = vrot.slane %v262, %v302
        %v304 = vlaneseq
        %v305 = vshrl.u32 %v304, 7
        %v306 = vsub.s32 2, %v305
        %v307 = vrot.slane %v262, %v306
        %v308 = vlaneseq
        %v309 = vshrl.u32 %v308, 7
        %v310 = vsub.s32 3, %v309
        %v311 = vrot.slane %v262, %v310
        %vm316 = vcmask 64512
        %v318 = vsel %vm316, %v263, 0
        %v321 = vsel %vm316, %v264, 0
        %v324 = vsel %vm316, %v265, 0
        %v327 = vsel %vm316, %v266, 0
        %v330 = vsel %vm316, %v267, 0
        %v333 = vsel %vm316, %v268, 0
        %v336 = vsel %vm316, %v269, 0
        %v339 = vsel %vm316, %v270, 0
        %v342 = vsel %vm316, %v271, 0
        %v345 = vsel %vm316, %v272, 0
        %v348 = vsel %vm316, %v273, 0
        %v351 = vsel %vm316, %v274, 0
        %v354 = vsel %vm316, %v275, 0
        %v357 = vsel %vm316, %v276, 0
        %v360 = vsel %vm316, %v277, 0
        %v363 = vsel %vm316, %v278, 0
        %v366 = vsel %vm316, %v279, 0
        %v369 = vsel %vm316, %v280, 0
        %v372 = vsel %vm316, %v281, 0
        %v375 = vsel %vm316, %v282, 0
        %v378 = vsel %vm316, %v283, 0
        %v381 = vsel %vm316, %v284, 0
        %v384 = vsel %vm316, %v285, 0
        %v387 = vsel %vm316, %v286, 0
        %v390 = vsel %vm316, %v287, 0
        %v393 = vsel %vm316, %v288, 0
        %v396 = vsel %vm316, %v289, 0
        %v399 = vsel %vm316, %v290, 0
        %v402 = vsel %vm316, %v291, 0
        %v405 = vsel %vm316, %v292, 0
        %v408 = vsel %vm316, %v293, 0
        %v411 = vsel %vm316, %v294, 0
        %413 = vmatprep.subr.mxu0 0.0
        %414 = vmatpush1.msra.mxu0 0.0
        %415 = vmatprep.subr.mxu0 0.0
        %416 = vmatpush1.msra.mxu0 0.0
        %417 = vmatprep.subr.mxu0 0.0
        %418 = vmatpush1.msra.mxu0 0.0
        %419 = vmatprep.subr.mxu0 0.0
        %420 = vmatpush1.msra.mxu0 0.0
        %421 = vmatprep.subr.mxu0 0.0
        %422 = vmatpush1.msra.mxu0 0.0
        %423 = vmatprep.subr.mxu0 0.0
        %424 = vmatpush1.msra.mxu0 0.0
        %425 = vmatprep.subr.mxu0 0.0
        %426 = vmatpush1.msra.mxu0 0.0
        %427 = vmatprep.subr.mxu0 0.0
        %428 = vmatpush1.msra.mxu0 0.0
        %429 = vmatprep.subr.mxu0 0.0
        %430 = vmatpush1.msra.mxu0 0.0
        %431 = vmatprep.subr.mxu0 0.0
        %432 = vmatpush1.msra.mxu0 0.0
        %433 = vmatprep.subr.mxu0 0.0
        %434 = vmatpush1.msra.mxu0 0.0
        %435 = vmatprep.subr.mxu0 0.0
        %436 = vmatpush1.msra.mxu0 0.0
        %437 = vmatprep.subr.mxu0 0.0
        %438 = vmatpush1.msra.mxu0 0.0
        %439 = vmatprep.subr.mxu0 0.0
        %440 = vmatpush1.msra.mxu0 0.0
        %441 = vmatprep.subr.mxu0 0.0
        %442 = vmatpush1.msra.mxu0 0.0
        %443 = vmatprep.subr.mxu0 %v259
        %444 = vmatpush1.msra.mxu0 %v258
        %445 = vmatprep.subr.mxu0 0.0
        %446 = vmatpush2.msra.mxu0 0.0
        %447 = vmatprep.subr.mxu0 0.0
        %448 = vmatpush2.msra.mxu0 0.0
        %449 = vmatprep.subr.mxu0 0.0
        %450 = vmatpush2.msra.mxu0 0.0
        %451 = vmatprep.subr.mxu0 0.0
        %452 = vmatpush2.msra.mxu0 0.0
        %453 = vmatprep.subr.mxu0 0.0
        %454 = vmatpush2.msra.mxu0 0.0
        %455 = vmatprep.subr.mxu0 0.0
        %456 = vmatpush2.msra.mxu0 0.0
        %457 = vmatprep.subr.mxu0 0.0
        %458 = vmatpush2.msra.mxu0 0.0
        %459 = vmatprep.subr.mxu0 0.0
        %460 = vmatpush2.msra.mxu0 0.0
        %461 = vmatprep.subr.mxu0 0.0
        %462 = vmatpush2.msra.mxu0 0.0
        %463 = vmatprep.subr.mxu0 0.0
        %464 = vmatpush2.msra.mxu0 0.0
        %465 = vmatprep.subr.mxu0 0.0
        %466 = vmatpush2.msra.mxu0 0.0
        %467 = vmatprep.subr.mxu0 0.0
        %468 = vmatpush2.msra.mxu0 0.0
        %469 = vmatprep.subr.mxu0 0.0
        %470 = vmatpush2.msra.mxu0 0.0
        %471 = vmatprep.subr.mxu0 0.0
        %472 = vmatpush2.msra.mxu0 0.0
        %473 = vmatprep.subr.mxu0 0.0
        %474 = vmatpush2.msra.mxu0 0.0
        %475 = vmatprep.subr.mxu0 0.0
        %476 = vmatpush2.msra.mxu0 0.0
        %477 = vmatprep.mubr.f32.mxu0 0.0
        %478 = vmatmul.mubr.f32.gmra.mxu0 %v318
        %v479 = vpop.f32.mrf.mxu0
        %v480 = vadd.f32 %v299, %v479
        %v481 = vpop.f32.mrf.mxu0
        %v482 = vadd.f32 %v303, %v481
        %483 = vmatprep.mubr.f32.mxu0 0.0
        %484 = vmatmul.mubr.f32.gmra.mxu0 %v321
        %v485 = vpop.f32.mrf.mxu0
        %v486 = vadd.f32 %v299, %v485
        %v487 = vpop.f32.mrf.mxu0
        %v488 = vadd.f32 %v303, %v487
        %489 = vmatprep.mubr.f32.mxu0 0.0
        %490 = vmatmul.mubr.f32.gmra.mxu0 %v324
        %v491 = vpop.f32.mrf.mxu0
        %v492 = vadd.f32 %v299, %v491
        %v493 = vpop.f32.mrf.mxu0
        %v494 = vadd.f32 %v303, %v493
        %495 = vmatprep.mubr.f32.mxu0 0.0
        %496 = vmatmul.mubr.f32.gmra.mxu0 %v327
        %v497 = vpop.f32.mrf.mxu0
        %v498 = vadd.f32 %v299, %v497
        %v499 = vpop.f32.mrf.mxu0
        %v500 = vadd.f32 %v303, %v499
        %501 = vmatprep.mubr.f32.mxu0 0.0
        %502 = vmatmul.mubr.f32.gmra.mxu0 %v330
        %v503 = vpop.f32.mrf.mxu0
        %v504 = vadd.f32 %v299, %v503
        %v505 = vpop.f32.mrf.mxu0
        %v506 = vadd.f32 %v303, %v505
        %507 = vmatprep.mubr.f32.mxu0 0.0
        %508 = vmatmul.mubr.f32.gmra.mxu0 %v333
        %v509 = vpop.f32.mrf.mxu0
        %v510 = vadd.f32 %v299, %v509
        %v511 = vpop.f32.mrf.mxu0
        %v512 = vadd.f32 %v303, %v511
        %513 = vmatprep.mubr.f32.mxu0 0.0
        %514 = vmatmul.mubr.f32.gmra.mxu0 %v336
        %v515 = vpop.f32.mrf.mxu0
        %v516 = vadd.f32 %v299, %v515
        %v517 = vpop.f32.mrf.mxu0
        %v518 = vadd.f32 %v303, %v517
        %519 = vmatprep.mubr.f32.mxu0 0.0
        %520 = vmatmul.mubr.f32.gmra.mxu0 %v339
        %v521 = vpop.f32.mrf.mxu0
        %v522 = vadd.f32 %v299, %v521
        %v523 = vpop.f32.mrf.mxu0
        %v524 = vadd.f32 %v303, %v523
        %525 = vmatprep.mubr.f32.mxu0 0.0
        %526 = vmatmul.mubr.f32.gmra.mxu0 %v342
        %v527 = vpop.f32.mrf.mxu0
        %v528 = vadd.f32 %v299, %v527
        %v529 = vpop.f32.mrf.mxu0
        %v530 = vadd.f32 %v303, %v529
        %531 = vmatprep.mubr.f32.mxu0 0.0
        %532 = vmatmul.mubr.f32.gmra.mxu0 %v345
        %v533 = vpop.f32.mrf.mxu0
        %v534 = vadd.f32 %v299, %v533
        %v535 = vpop.f32.mrf.mxu0
        %v536 = vadd.f32 %v303, %v535
        %537 = vmatprep.mubr.f32.mxu0 0.0
        %538 = vmatmul.mubr.f32.gmra.mxu0 %v348
        %v539 = vpop.f32.mrf.mxu0
        %v540 = vadd.f32 %v299, %v539
        %v541 = vpop.f32.mrf.mxu0
        %v542 = vadd.f32 %v303, %v541
        %543 = vmatprep.mubr.f32.mxu0 0.0
        %544 = vmatmul.mubr.f32.gmra.mxu0 %v351
        %v545 = vpop.f32.mrf.mxu0
        %v546 = vadd.f32 %v299, %v545
        %v547 = vpop.f32.mrf.mxu0
        %v548 = vadd.f32 %v303, %v547
        %549 = vmatprep.mubr.f32.mxu0 0.0
        %550 = vmatmul.mubr.f32.gmra.mxu0 %v354
        %v551 = vpop.f32.mrf.mxu0
        %v552 = vadd.f32 %v299, %v551
        %v553 = vpop.f32.mrf.mxu0
        %v554 = vadd.f32 %v303, %v553
        %555 = vmatprep.mubr.f32.mxu0 0.0
        %556 = vmatmul.mubr.f32.gmra.mxu0 %v357
        %v557 = vpop.f32.mrf.mxu0
        %v558 = vadd.f32 %v299, %v557
        %v559 = vpop.f32.mrf.mxu0
        %v560 = vadd.f32 %v303, %v559
        %561 = vmatprep.mubr.f32.mxu0 0.0
        %562 = vmatmul.mubr.f32.gmra.mxu0 %v360
        %v563 = vpop.f32.mrf.mxu0
        %v564 = vadd.f32 %v299, %v563
        %v565 = vpop.f32.mrf.mxu0
        %v566 = vadd.f32 %v303, %v565
        %567 = vmatprep.mubr.f32.mxu0 0.0
        %568 = vmatmul.mubr.f32.gmra.mxu0 %v363
        %v569 = vpop.f32.mrf.mxu0
        %v570 = vadd.f32 %v299, %v569
        %v571 = vpop.f32.mrf.mxu0
        %v572 = vadd.f32 %v303, %v571
        %573 = vmatprep.mubr.f32.mxu0 0.0
        %574 = vmatmul.mubr.f32.gmra.mxu0 %v366
        %v575 = vpop.f32.mrf.mxu0
        %v576 = vadd.f32 %v299, %v575
        %v577 = vpop.f32.mrf.mxu0
        %v578 = vadd.f32 %v303, %v577
        %579 = vmatprep.mubr.f32.mxu0 0.0
        %580 = vmatmul.mubr.f32.gmra.mxu0 %v369
        %v581 = vpop.f32.mrf.mxu0
        %v582 = vadd.f32 %v299, %v581
        %v583 = vpop.f32.mrf.mxu0
        %v584 = vadd.f32 %v303, %v583
        %585 = vmatprep.mubr.f32.mxu0 0.0
        %586 = vmatmul.mubr.f32.gmra.mxu0 %v372
        %v587 = vpop.f32.mrf.mxu0
        %v588 = vadd.f32 %v299, %v587
        %v589 = vpop.f32.mrf.mxu0
        %v590 = vadd.f32 %v303, %v589
        %591 = vmatprep.mubr.f32.mxu0 0.0
        %592 = vmatmul.mubr.f32.gmra.mxu0 %v375
        %v593 = vpop.f32.mrf.mxu0
        %v594 = vadd.f32 %v299, %v593
        %v595 = vpop.f32.mrf.mxu0
        %v596 = vadd.f32 %v303, %v595
        %597 = vmatprep.mubr.f32.mxu0 0.0
        %598 = vmatmul.mubr.f32.gmra.mxu0 %v378
        %v599 = vpop.f32.mrf.mxu0
        %v600 = vadd.f32 %v299, %v599
        %v601 = vpop.f32.mrf.mxu0
        %v602 = vadd.f32 %v303, %v601
        %603 = vmatprep.mubr.f32.mxu0 0.0
        %604 = vmatmul.mubr.f32.gmra.mxu0 %v381
        %v605 = vpop.f32.mrf.mxu0
        %v606 = vadd.f32 %v299, %v605
        %v607 = vpop.f32.mrf.mxu0
        %v608 = vadd.f32 %v303, %v607
        %609 = vmatprep.mubr.f32.mxu0 0.0
        %610 = vmatmul.mubr.f32.gmra.mxu0 %v384
        %v611 = vpop.f32.mrf.mxu0
        %v612 = vadd.f32 %v299, %v611
        %v613 = vpop.f32.mrf.mxu0
        %v614 = vadd.f32 %v303, %v613
        %615 = vmatprep.mubr.f32.mxu0 0.0
        %616 = vmatmul.mubr.f32.gmra.mxu0 %v387
        %v617 = vpop.f32.mrf.mxu0
        %v618 = vadd.f32 %v299, %v617
        %v619 = vpop.f32.mrf.mxu0
        %v620 = vadd.f32 %v303, %v619
        %621 = vmatprep.mubr.f32.mxu0 0.0
        %622 = vmatmul.mubr.f32.gmra.mxu0 %v390
        %v623 = vpop.f32.mrf.mxu0
        %v624 = vadd.f32 %v299, %v623
        %v625 = vpop.f32.mrf.mxu0
        %v626 = vadd.f32 %v303, %v625
        %627 = vmatprep.mubr.f32.mxu0 0.0
        %628 = vmatmul.mubr.f32.gmra.mxu0 %v393
        %v629 = vpop.f32.mrf.mxu0
        %v630 = vadd.f32 %v299, %v629
        %v631 = vpop.f32.mrf.mxu0
        %v632 = vadd.f32 %v303, %v631
        %633 = vmatprep.mubr.f32.mxu0 0.0
        %634 = vmatmul.mubr.f32.gmra.mxu0 %v396
        %v635 = vpop.f32.mrf.mxu0
        %v636 = vadd.f32 %v299, %v635
        %v637 = vpop.f32.mrf.mxu0
        %v638 = vadd.f32 %v303, %v637
        %639 = vmatprep.mubr.f32.mxu0 0.0
        %640 = vmatmul.mubr.f32.gmra.mxu0 %v399
        %v641 = vpop.f32.mrf.mxu0
        %v642 = vadd.f32 %v299, %v641
        %v643 = vpop.f32.mrf.mxu0
        %v644 = vadd.f32 %v303, %v643
        %645 = vmatprep.mubr.f32.mxu0 0.0
        %646 = vmatmul.mubr.f32.gmra.mxu0 %v402
        %v647 = vpop.f32.mrf.mxu0
        %v648 = vadd.f32 %v299, %v647
        %v649 = vpop.f32.mrf.mxu0
        %v650 = vadd.f32 %v303, %v649
        %651 = vmatprep.mubr.f32.mxu0 0.0
        %652 = vmatmul.mubr.f32.gmra.mxu0 %v405
        %v653 = vpop.f32.mrf.mxu0
        %v654 = vadd.f32 %v299, %v653
        %v655 = vpop.f32.mrf.mxu0
        %v656 = vadd.f32 %v303, %v655
        %657 = vmatprep.mubr.f32.mxu0 0.0
        %658 = vmatmul.mubr.f32.gmra.mxu0 %v408
        %v659 = vpop.f32.mrf.mxu0
        %v660 = vadd.f32 %v299, %v659
        %v661 = vpop.f32.mrf.mxu0
        %v662 = vadd.f32 %v303, %v661
        %663 = vmatprep.mubr.f32.mxu0 0.0
        %664 = vmatmul.mubr.f32.gmra.mxu0 %v411
        %v665 = vpop.f32.mrf.mxu0
        %v666 = vadd.f32 %v299, %v665
        %v667 = vpop.f32.mrf.mxu0
        %v668 = vadd.f32 %v303, %v667
        %669 = vdwg.mxu0
        %670 = vmatprep.subr.mxu0 0.0
        %671 = vmatpush1.msra.mxu0 0.0
        %672 = vmatprep.subr.mxu0 0.0
        %673 = vmatpush1.msra.mxu0 0.0
        %674 = vmatprep.subr.mxu0 0.0
        %675 = vmatpush1.msra.mxu0 0.0
        %676 = vmatprep.subr.mxu0 0.0
        %677 = vmatpush1.msra.mxu0 0.0
        %678 = vmatprep.subr.mxu0 0.0
        %679 = vmatpush1.msra.mxu0 0.0
        %680 = vmatprep.subr.mxu0 0.0
        %681 = vmatpush1.msra.mxu0 0.0
        %682 = vmatprep.subr.mxu0 0.0
        %683 = vmatpush1.msra.mxu0 0.0
        %684 = vmatprep.subr.mxu0 0.0
        %685 = vmatpush1.msra.mxu0 0.0
        %686 = vmatprep.subr.mxu0 0.0
        %687 = vmatpush1.msra.mxu0 0.0
        %688 = vmatprep.subr.mxu0 0.0
        %689 = vmatpush1.msra.mxu0 0.0
        %690 = vmatprep.subr.mxu0 0.0
        %691 = vmatpush1.msra.mxu0 0.0
        %692 = vmatprep.subr.mxu0 0.0
        %693 = vmatpush1.msra.mxu0 0.0
        %694 = vmatprep.subr.mxu0 0.0
        %695 = vmatpush1.msra.mxu0 0.0
        %696 = vmatprep.subr.mxu0 0.0
        %697 = vmatpush1.msra.mxu0 0.0
        %698 = vmatprep.subr.mxu0 0.0
        %699 = vmatpush1.msra.mxu0 0.0
        %700 = vmatprep.subr.mxu0 %v261
        %701 = vmatpush1.msra.mxu0 %v260
        %702 = vmatprep.subr.mxu0 0.0
        %703 = vmatpush2.msra.mxu0 0.0
        %704 = vmatprep.subr.mxu0 0.0
        %705 = vmatpush2.msra.mxu0 0.0
        %706 = vmatprep.subr.mxu0 0.0
        %707 = vmatpush2.msra.mxu0 0.0
        %708 = vmatprep.subr.mxu0 0.0
        %709 = vmatpush2.msra.mxu0 0.0
        %710 = vmatprep.subr.mxu0 0.0
        %711 = vmatpush2.msra.mxu0 0.0
        %712 = vmatprep.subr.mxu0 0.0
        %713 = vmatpush2.msra.mxu0 0.0
        %714 = vmatprep.subr.mxu0 0.0
        %715 = vmatpush2.msra.mxu0 0.0
        %716 = vmatprep.subr.mxu0 0.0
        %717 = vmatpush2.msra.mxu0 0.0
        %718 = vmatprep.subr.mxu0 0.0
        %719 = vmatpush2.msra.mxu0 0.0
        %720 = vmatprep.subr.mxu0 0.0
        %721 = vmatpush2.msra.mxu0 0.0
        %722 = vmatprep.subr.mxu0 0.0
        %723 = vmatpush2.msra.mxu0 0.0
        %724 = vmatprep.subr.mxu0 0.0
        %725 = vmatpush2.msra.mxu0 0.0
        %726 = vmatprep.subr.mxu0 0.0
        %727 = vmatpush2.msra.mxu0 0.0
        %728 = vmatprep.subr.mxu0 0.0
        %729 = vmatpush2.msra.mxu0 0.0
        %730 = vmatprep.subr.mxu0 0.0
        %731 = vmatpush2.msra.mxu0 0.0
        %732 = vmatprep.subr.mxu0 0.0
        %733 = vmatpush2.msra.mxu0 0.0
        %734 = vmatprep.mubr.f32.mxu0 0.0
        %735 = vmatmul.mubr.f32.gmra.mxu0 %v318
        %v736 = vpop.f32.mrf.mxu0
        %v737 = vadd.f32 %v307, %v736
        %v738 = vpop.f32.mrf.mxu0
        %v739 = vadd.f32 %v311, %v738
        %740 = vmatprep.mubr.f32.mxu0 0.0
        %741 = vmatmul.mubr.f32.gmra.mxu0 %v321
        %v742 = vpop.f32.mrf.mxu0
        %v743 = vadd.f32 %v307, %v742
        %v744 = vpop.f32.mrf.mxu0
        %v745 = vadd.f32 %v311, %v744
        %746 = vmatprep.mubr.f32.mxu0 0.0
        %747 = vmatmul.mubr.f32.gmra.mxu0 %v324
        %v748 = vpop.f32.mrf.mxu0
        %v749 = vadd.f32 %v307, %v748
        %v750 = vpop.f32.mrf.mxu0
        %v751 = vadd.f32 %v311, %v750
        %752 = vmatprep.mubr.f32.mxu0 0.0
        %753 = vmatmul.mubr.f32.gmra.mxu0 %v327
        %v754 = vpop.f32.mrf.mxu0
        %v755 = vadd.f32 %v307, %v754
        %v756 = vpop.f32.mrf.mxu0
        %v757 = vadd.f32 %v311, %v756
        %758 = vmatprep.mubr.f32.mxu0 0.0
        %759 = vmatmul.mubr.f32.gmra.mxu0 %v330
        %v760 = vpop.f32.mrf.mxu0
        %v761 = vadd.f32 %v307, %v760
        %v762 = vpop.f32.mrf.mxu0
        %v763 = vadd.f32 %v311, %v762
        %764 = vmatprep.mubr.f32.mxu0 0.0
        %765 = vmatmul.mubr.f32.gmra.mxu0 %v333
        %v766 = vpop.f32.mrf.mxu0
        %v767 = vadd.f32 %v307, %v766
        %v768 = vpop.f32.mrf.mxu0
        %v769 = vadd.f32 %v311, %v768
        %770 = vmatprep.mubr.f32.mxu0 0.0
        %771 = vmatmul.mubr.f32.gmra.mxu0 %v336
        %v772 = vpop.f32.mrf.mxu0
        %v773 = vadd.f32 %v307, %v772
        %v774 = vpop.f32.mrf.mxu0
        %v775 = vadd.f32 %v311, %v774
        %776 = vmatprep.mubr.f32.mxu0 0.0
        %777 = vmatmul.mubr.f32.gmra.mxu0 %v339
        %v778 = vpop.f32.mrf.mxu0
        %v779 = vadd.f32 %v307, %v778
        %v780 = vpop.f32.mrf.mxu0
        %v781 = vadd.f32 %v311, %v780
        %782 = vmatprep.mubr.f32.mxu0 0.0
        %783 = vmatmul.mubr.f32.gmra.mxu0 %v342
        %v784 = vpop.f32.mrf.mxu0
        %v785 = vadd.f32 %v307, %v784
        %v786 = vpop.f32.mrf.mxu0
        %v787 = vadd.f32 %v311, %v786
        %788 = vmatprep.mubr.f32.mxu0 0.0
        %789 = vmatmul.mubr.f32.gmra.mxu0 %v345
        %v790 = vpop.f32.mrf.mxu0
        %v791 = vadd.f32 %v307, %v790
        %v792 = vpop.f32.mrf.mxu0
        %v793 = vadd.f32 %v311, %v792
        %794 = vmatprep.mubr.f32.mxu0 0.0
        %795 = vmatmul.mubr.f32.gmra.mxu0 %v348
        %v796 = vpop.f32.mrf.mxu0
        %v797 = vadd.f32 %v307, %v796
        %v798 = vpop.f32.mrf.mxu0
        %v799 = vadd.f32 %v311, %v798
        %800 = vmatprep.mubr.f32.mxu0 0.0
        %801 = vmatmul.mubr.f32.gmra.mxu0 %v351
        %v802 = vpop.f32.mrf.mxu0
        %v803 = vadd.f32 %v307, %v802
        %v804 = vpop.f32.mrf.mxu0
        %v805 = vadd.f32 %v311, %v804
        %806 = vmatprep.mubr.f32.mxu0 0.0
        %807 = vmatmul.mubr.f32.gmra.mxu0 %v354
        %v808 = vpop.f32.mrf.mxu0
        %v809 = vadd.f32 %v307, %v808
        %v810 = vpop.f32.mrf.mxu0
        %v811 = vadd.f32 %v311, %v810
        %812 = vmatprep.mubr.f32.mxu0 0.0
        %813 = vmatmul.mubr.f32.gmra.mxu0 %v357
        %v814 = vpop.f32.mrf.mxu0
        %v815 = vadd.f32 %v307, %v814
        %v816 = vpop.f32.mrf.mxu0
        %v817 = vadd.f32 %v311, %v816
        %818 = vmatprep.mubr.f32.mxu0 0.0
        %819 = vmatmul.mubr.f32.gmra.mxu0 %v360
        %v820 = vpop.f32.mrf.mxu0
        %v821 = vadd.f32 %v307, %v820
        %v822 = vpop.f32.mrf.mxu0
        %v823 = vadd.f32 %v311, %v822
        %824 = vmatprep.mubr.f32.mxu0 0.0
        %825 = vmatmul.mubr.f32.gmra.mxu0 %v363
        %v826 = vpop.f32.mrf.mxu0
        %v827 = vadd.f32 %v307, %v826
        %v828 = vpop.f32.mrf.mxu0
        %v829 = vadd.f32 %v311, %v828
        %830 = vmatprep.mubr.f32.mxu0 0.0
        %831 = vmatmul.mubr.f32.gmra.mxu0 %v366
        %v832 = vpop.f32.mrf.mxu0
        %v833 = vadd.f32 %v307, %v832
        %v834 = vpop.f32.mrf.mxu0
        %v835 = vadd.f32 %v311, %v834
        %836 = vmatprep.mubr.f32.mxu0 0.0
        %837 = vmatmul.mubr.f32.gmra.mxu0 %v369
        %v838 = vpop.f32.mrf.mxu0
        %v839 = vadd.f32 %v307, %v838
        %v840 = vpop.f32.mrf.mxu0
        %v841 = vadd.f32 %v311, %v840
        %842 = vmatprep.mubr.f32.mxu0 0.0
        %843 = vmatmul.mubr.f32.gmra.mxu0 %v372
        %v844 = vpop.f32.mrf.mxu0
        %v845 = vadd.f32 %v307, %v844
        %v846 = vpop.f32.mrf.mxu0
        %v847 = vadd.f32 %v311, %v846
        %848 = vmatprep.mubr.f32.mxu0 0.0
        %849 = vmatmul.mubr.f32.gmra.mxu0 %v375
        %v850 = vpop.f32.mrf.mxu0
        %v851 = vadd.f32 %v307, %v850
        %v852 = vpop.f32.mrf.mxu0
        %v853 = vadd.f32 %v311, %v852
        %854 = vmatprep.mubr.f32.mxu0 0.0
        %855 = vmatmul.mubr.f32.gmra.mxu0 %v378
        %v856 = vpop.f32.mrf.mxu0
        %v857 = vadd.f32 %v307, %v856
        %v858 = vpop.f32.mrf.mxu0
        %v859 = vadd.f32 %v311, %v858
        %860 = vmatprep.mubr.f32.mxu0 0.0
        %861 = vmatmul.mubr.f32.gmra.mxu0 %v381
        %v862 = vpop.f32.mrf.mxu0
        %v863 = vadd.f32 %v307, %v862
        %v864 = vpop.f32.mrf.mxu0
        %v865 = vadd.f32 %v311, %v864
        %866 = vmatprep.mubr.f32.mxu0 0.0
        %867 = vmatmul.mubr.f32.gmra.mxu0 %v384
        %v868 = vpop.f32.mrf.mxu0
        %v869 = vadd.f32 %v307, %v868
        %v870 = vpop.f32.mrf.mxu0
        %v871 = vadd.f32 %v311, %v870
        %872 = vmatprep.mubr.f32.mxu0 0.0
        %873 = vmatmul.mubr.f32.gmra.mxu0 %v387
        %v874 = vpop.f32.mrf.mxu0
        %v875 = vadd.f32 %v307, %v874
        %v876 = vpop.f32.mrf.mxu0
        %v877 = vadd.f32 %v311, %v876
        %878 = vmatprep.mubr.f32.mxu0 0.0
        %879 = vmatmul.mubr.f32.gmra.mxu0 %v390
        %v880 = vpop.f32.mrf.mxu0
        %v881 = vadd.f32 %v307, %v880
        %v882 = vpop.f32.mrf.mxu0
        %v883 = vadd.f32 %v311, %v882
        %884 = vmatprep.mubr.f32.mxu0 0.0
        %885 = vmatmul.mubr.f32.gmra.mxu0 %v393
        %v886 = vpop.f32.mrf.mxu0
        %v887 = vadd.f32 %v307, %v886
        %v888 = vpop.f32.mrf.mxu0
        %v889 = vadd.f32 %v311, %v888
        %890 = vmatprep.mubr.f32.mxu0 0.0
        %891 = vmatmul.mubr.f32.gmra.mxu0 %v396
        %v892 = vpop.f32.mrf.mxu0
        %v893 = vadd.f32 %v307, %v892
        %v894 = vpop.f32.mrf.mxu0
        %v895 = vadd.f32 %v311, %v894
        %896 = vmatprep.mubr.f32.mxu0 0.0
        %897 = vmatmul.mubr.f32.gmra.mxu0 %v399
        %v898 = vpop.f32.mrf.mxu0
        %v899 = vadd.f32 %v307, %v898
        %v900 = vpop.f32.mrf.mxu0
        %v901 = vadd.f32 %v311, %v900
        %902 = vmatprep.mubr.f32.mxu0 0.0
        %903 = vmatmul.mubr.f32.gmra.mxu0 %v402
        %v904 = vpop.f32.mrf.mxu0
        %v905 = vadd.f32 %v307, %v904
        %v906 = vpop.f32.mrf.mxu0
        %v907 = vadd.f32 %v311, %v906
        %908 = vmatprep.mubr.f32.mxu0 0.0
        %909 = vmatmul.mubr.f32.gmra.mxu0 %v405
        %v910 = vpop.f32.mrf.mxu0
        %v911 = vadd.f32 %v307, %v910
        %v912 = vpop.f32.mrf.mxu0
        %v913 = vadd.f32 %v311, %v912
        %914 = vmatprep.mubr.f32.mxu0 0.0
        %915 = vmatmul.mubr.f32.gmra.mxu0 %v408
        %v916 = vpop.f32.mrf.mxu0
        %v917 = vadd.f32 %v307, %v916
        %v918 = vpop.f32.mrf.mxu0
        %v919 = vadd.f32 %v311, %v918
        %920 = vmatprep.mubr.f32.mxu0 0.0
        %921 = vmatmul.mubr.f32.gmra.mxu0 %v411
        %v922 = vpop.f32.mrf.mxu0
        %v923 = vadd.f32 %v307, %v922
        %v924 = vpop.f32.mrf.mxu0
        %v925 = vadd.f32 %v311, %v924
        %926 = vdwg.mxu0
        %v927 = vmax.f32 %v480, 0.0
        %v928 = vmax.f32 %v482, 0.0
        %v929 = vmax.f32 %v737, 0.0
        %v930 = vmax.f32 %v739, 0.0
        %v931 = vmax.f32 %v486, 0.0
        %v932 = vmax.f32 %v488, 0.0
        %v933 = vmax.f32 %v743, 0.0
        %v934 = vmax.f32 %v745, 0.0
        %v935 = vmax.f32 %v492, 0.0
        %v936 = vmax.f32 %v494, 0.0
        %v937 = vmax.f32 %v749, 0.0
        %v938 = vmax.f32 %v751, 0.0
        %v939 = vmax.f32 %v498, 0.0
        %v940 = vmax.f32 %v500, 0.0
        %v941 = vmax.f32 %v755, 0.0
        %v942 = vmax.f32 %v757, 0.0
        %v943 = vmax.f32 %v504, 0.0
        %v944 = vmax.f32 %v506, 0.0
        %v945 = vmax.f32 %v761, 0.0
        %v946 = vmax.f32 %v763, 0.0
        %v947 = vmax.f32 %v510, 0.0
        %v948 = vmax.f32 %v512, 0.0
        %v949 = vmax.f32 %v767, 0.0
        %v950 = vmax.f32 %v769, 0.0
        %v951 = vmax.f32 %v516, 0.0
        %v952 = vmax.f32 %v518, 0.0
        %v953 = vmax.f32 %v773, 0.0
        %v954 = vmax.f32 %v775, 0.0
        %v955 = vmax.f32 %v522, 0.0
        %v956 = vmax.f32 %v524, 0.0
        %v957 = vmax.f32 %v779, 0.0
        %v958 = vmax.f32 %v781, 0.0
        %v959 = vmax.f32 %v528, 0.0
        %v960 = vmax.f32 %v530, 0.0
        %v961 = vmax.f32 %v785, 0.0
        %v962 = vmax.f32 %v787, 0.0
        %v963 = vmax.f32 %v534, 0.0
        %v964 = vmax.f32 %v536, 0.0
        %v965 = vmax.f32 %v791, 0.0
        %v966 = vmax.f32 %v793, 0.0
        %v967 = vmax.f32 %v540, 0.0
        %v968 = vmax.f32 %v542, 0.0
        %v969 = vmax.f32 %v797, 0.0
        %v970 = vmax.f32 %v799, 0.0
        %v971 = vmax.f32 %v546, 0.0
        %v972 = vmax.f32 %v548, 0.0
        %v973 = vmax.f32 %v803, 0.0
        %v974 = vmax.f32 %v805, 0.0
        %v975 = vmax.f32 %v552, 0.0
        %v976 = vmax.f32 %v554, 0.0
        %v977 = vmax.f32 %v809, 0.0
        %v978 = vmax.f32 %v811, 0.0
        %v979 = vmax.f32 %v558, 0.0
        %v980 = vmax.f32 %v560, 0.0
        %v981 = vmax.f32 %v815, 0.0
        %v982 = vmax.f32 %v817, 0.0
        %v983 = vmax.f32 %v564, 0.0
        %v984 = vmax.f32 %v566, 0.0
        %v985 = vmax.f32 %v821, 0.0
        %v986 = vmax.f32 %v823, 0.0
        %v987 = vmax.f32 %v570, 0.0
        %v988 = vmax.f32 %v572, 0.0
        %v989 = vmax.f32 %v827, 0.0
        %v990 = vmax.f32 %v829, 0.0
        %v991 = vmax.f32 %v576, 0.0
        %v992 = vmax.f32 %v578, 0.0
        %v993 = vmax.f32 %v833, 0.0
        %v994 = vmax.f32 %v835, 0.0
        %v995 = vmax.f32 %v582, 0.0
        %v996 = vmax.f32 %v584, 0.0
        %v997 = vmax.f32 %v839, 0.0
        %v998 = vmax.f32 %v841, 0.0
        %v999 = vmax.f32 %v588, 0.0
        %v1000 = vmax.f32 %v590, 0.0
        %v1001 = vmax.f32 %v845, 0.0
        %v1002 = vmax.f32 %v847, 0.0
        %v1003 = vmax.f32 %v594, 0.0
        %v1004 = vmax.f32 %v596, 0.0
        %v1005 = vmax.f32 %v851, 0.0
        %v1006 = vmax.f32 %v853, 0.0
        %v1007 = vmax.f32 %v600, 0.0
        %v1008 = vmax.f32 %v602, 0.0
        %v1009 = vmax.f32 %v857, 0.0
        %v1010 = vmax.f32 %v859, 0.0
        %v1011 = vmax.f32 %v606, 0.0
        %v1012 = vmax.f32 %v608, 0.0
        %v1013 = vmax.f32 %v863, 0.0
        %v1014 = vmax.f32 %v865, 0.0
        %v1015 = vmax.f32 %v612, 0.0
        %v1016 = vmax.f32 %v614, 0.0
        %v1017 = vmax.f32 %v869, 0.0
        %v1018 = vmax.f32 %v871, 0.0
        %v1019 = vmax.f32 %v618, 0.0
        %v1020 = vmax.f32 %v620, 0.0
        %v1021 = vmax.f32 %v875, 0.0
        %v1022 = vmax.f32 %v877, 0.0
        %v1023 = vmax.f32 %v624, 0.0
        %v1024 = vmax.f32 %v626, 0.0
        %v1025 = vmax.f32 %v881, 0.0
        %v1026 = vmax.f32 %v883, 0.0
        %v1027 = vmax.f32 %v630, 0.0
        %v1028 = vmax.f32 %v632, 0.0
        %v1029 = vmax.f32 %v887, 0.0
        %v1030 = vmax.f32 %v889, 0.0
        %v1031 = vmax.f32 %v636, 0.0
        %v1032 = vmax.f32 %v638, 0.0
        %v1033 = vmax.f32 %v893, 0.0
        %v1034 = vmax.f32 %v895, 0.0
        %v1035 = vmax.f32 %v642, 0.0
        %v1036 = vmax.f32 %v644, 0.0
        %v1037 = vmax.f32 %v899, 0.0
        %v1038 = vmax.f32 %v901, 0.0
        %v1039 = vmax.f32 %v648, 0.0
        %v1040 = vmax.f32 %v650, 0.0
        %v1041 = vmax.f32 %v905, 0.0
        %v1042 = vmax.f32 %v907, 0.0
        %v1043 = vmax.f32 %v654, 0.0
        %v1044 = vmax.f32 %v656, 0.0
        %v1045 = vmax.f32 %v911, 0.0
        %v1046 = vmax.f32 %v913, 0.0
        %v1047 = vmax.f32 %v660, 0.0
        %v1048 = vmax.f32 %v662, 0.0
        %v1049 = vmax.f32 %v917, 0.0
        %v1050 = vmax.f32 %v919, 0.0
        %v1051 = vmax.f32 %v666, 0.0
        %v1052 = vmax.f32 %v668, 0.0
        %v1053 = vmax.f32 %v923, 0.0
        %v1054 = vmax.f32 %v925, 0.0
        %v1055 = vld [vmem:[#allocation2] sm:$0xff]
        %v1056 = vld [vmem:[#allocation2 + $0x8] sm:$0xff]
        %v1057 = vld [vmem:[#allocation2 + $0x10] sm:$0xff]
        %v1058 = vld [vmem:[#allocation2 + $0x18] sm:$0xff]
        %v1059 = vadd.f32 %v927, %v931
        %v1060 = vadd.f32 %v1059, %v935
        %v1061 = vadd.f32 %v1060, %v939
        %v1062 = vadd.f32 %v1061, %v943
        %v1063 = vadd.f32 %v1062, %v947
        %v1064 = vadd.f32 %v1063, %v951
        %v1065 = vadd.f32 %v1064, %v955
        %v1066 = vadd.f32 %v1065, %v959
        %v1067 = vadd.f32 %v1066, %v963
        %v1068 = vadd.f32 %v1067, %v967
        %v1069 = vadd.f32 %v1068, %v971
        %v1070 = vadd.f32 %v1069, %v975
        %v1071 = vadd.f32 %v1070, %v979
        %v1072 = vadd.f32 %v1071, %v983
        %v1073 = vadd.f32 %v1072, %v987
        %v1074 = vadd.f32 %v1073, %v991
        %v1075 = vadd.f32 %v1074, %v995
        %v1076 = vadd.f32 %v1075, %v999
        %v1077 = vadd.f32 %v1076, %v1003
        %v1078 = vadd.f32 %v1077, %v1007
        %v1079 = vadd.f32 %v1078, %v1011
        %v1080 = vadd.f32 %v1079, %v1015
        %v1081 = vadd.f32 %v1080, %v1019
        %v1082 = vadd.f32 %v1081, %v1023
        %v1083 = vadd.f32 %v1082, %v1027
        %v1084 = vadd.f32 %v1083, %v1031
        %v1085 = vadd.f32 %v1084, %v1035
        %v1086 = vadd.f32 %v1085, %v1039
        %v1087 = vadd.f32 %v1086, %v1043
        %v1088 = vadd.f32 %v1087, %v1047
        %v1089 = vadd.f32 %v1088, %v1051
        %v1090 = vadd.f32 %v928, %v932
        %v1091 = vadd.f32 %v1090, %v936
        %v1092 = vadd.f32 %v1091, %v940
        %v1093 = vadd.f32 %v1092, %v944
        %v1094 = vadd.f32 %v1093, %v948
        %v1095 = vadd.f32 %v1094, %v952
        %v1096 = vadd.f32 %v1095, %v956
        %v1097 = vadd.f32 %v1096, %v960
        %v1098 = vadd.f32 %v1097, %v964
        %v1099 = vadd.f32 %v1098, %v968
        %v1100 = vadd.f32 %v1099, %v972
        %v1101 = vadd.f32 %v1100, %v976
        %v1102 = vadd.f32 %v1101, %v980
        %v1103 = vadd.f32 %v1102, %v984
        %v1104 = vadd.f32 %v1103, %v988
        %v1105 = vadd.f32 %v1104, %v992
        %v1106 = vadd.f32 %v1105, %v996
        %v1107 = vadd.f32 %v1106, %v1000
        %v1108 = vadd.f32 %v1107, %v1004
        %v1109 = vadd.f32 %v1108, %v1008
        %v1110 = vadd.f32 %v1109, %v1012
        %v1111 = vadd.f32 %v1110, %v1016
        %v1112 = vadd.f32 %v1111, %v1020
        %v1113 = vadd.f32 %v1112, %v1024
        %v1114 = vadd.f32 %v1113, %v1028
        %v1115 = vadd.f32 %v1114, %v1032
        %v1116 = vadd.f32 %v1115, %v1036
        %v1117 = vadd.f32 %v1116, %v1040
        %v1118 = vadd.f32 %v1117, %v1044
        %v1119 = vadd.f32 %v1118, %v1048
        %v1120 = vadd.f32 %v1119, %v1052
        %v1121 = vadd.f32 %v929, %v933
        %v1122 = vadd.f32 %v1121, %v937
        %v1123 = vadd.f32 %v1122, %v941
        %v1124 = vadd.f32 %v1123, %v945
        %v1125 = vadd.f32 %v1124, %v949
        %v1126 = vadd.f32 %v1125, %v953
        %v1127 = vadd.f32 %v1126, %v957
        %v1128 = vadd.f32 %v1127, %v961
        %v1129 = vadd.f32 %v1128, %v965
        %v1130 = vadd.f32 %v1129, %v969
        %v1131 = vadd.f32 %v1130, %v973
        %v1132 = vadd.f32 %v1131, %v977
        %v1133 = vadd.f32 %v1132, %v981
        %v1134 = vadd.f32 %v1133, %v985
        %v1135 = vadd.f32 %v1134, %v989
        %v1136 = vadd.f32 %v1135, %v993
        %v1137 = vadd.f32 %v1136, %v997
        %v1138 = vadd.f32 %v1137, %v1001
        %v1139 = vadd.f32 %v1138, %v1005
        %v1140 = vadd.f32 %v1139, %v1009
        %v1141 = vadd.f32 %v1140, %v1013
        %v1142 = vadd.f32 %v1141, %v1017
        %v1143 = vadd.f32 %v1142, %v1021
        %v1144 = vadd.f32 %v1143, %v1025
        %v1145 = vadd.f32 %v1144, %v1029
        %v1146 = vadd.f32 %v1145, %v1033
        %v1147 = vadd.f32 %v1146, %v1037
        %v1148 = vadd.f32 %v1147, %v1041
        %v1149 = vadd.f32 %v1148, %v1045
        %v1150 = vadd.f32 %v1149, %v1049
        %v1151 = vadd.f32 %v1150, %v1053
        %v1152 = vadd.f32 %v930, %v934
        %v1153 = vadd.f32 %v1152, %v938
        %v1154 = vadd.f32 %v1153, %v942
        %v1155 = vadd.f32 %v1154, %v946
        %v1156 = vadd.f32 %v1155, %v950
        %v1157 = vadd.f32 %v1156, %v954
        %v1158 = vadd.f32 %v1157, %v958
        %v1159 = vadd.f32 %v1158, %v962
        %v1160 = vadd.f32 %v1159, %v966
        %v1161 = vadd.f32 %v1160, %v970
        %v1162 = vadd.f32 %v1161, %v974
        %v1163 = vadd.f32 %v1162, %v978
        %v1164 = vadd.f32 %v1163, %v982
        %v1165 = vadd.f32 %v1164, %v986
        %v1166 = vadd.f32 %v1165, %v990
        %v1167 = vadd.f32 %v1166, %v994
        %v1168 = vadd.f32 %v1167, %v998
        %v1169 = vadd.f32 %v1168, %v1002
        %v1170 = vadd.f32 %v1169, %v1006
        %v1171 = vadd.f32 %v1170, %v1010
        %v1172 = vadd.f32 %v1171, %v1014
        %v1173 = vadd.f32 %v1172, %v1018
        %v1174 = vadd.f32 %v1173, %v1022
        %v1175 = vadd.f32 %v1174, %v1026
        %v1176 = vadd.f32 %v1175, %v1030
        %v1177 = vadd.f32 %v1176, %v1034
        %v1178 = vadd.f32 %v1177, %v1038
        %v1179 = vadd.f32 %v1178, %v1042
        %v1180 = vadd.f32 %v1179, %v1046
        %v1181 = vadd.f32 %v1180, %v1050
        %v1182 = vadd.f32 %v1181, %v1054
        %v1183 = vadd.f32 %v1055, %v1089
        %v1184 = vadd.f32 %v1056, %v1120
        %v1185 = vadd.f32 %v1057, %v1151
        %v1186 = vadd.f32 %v1058, %v1182
        %1187 = vst [vmem:[#allocation2] sm:$0xff] %v1183
        %1188 = vst [vmem:[#allocation2 + $0x8] sm:$0xff] %v1184
        %1189 = vst [vmem:[#allocation2 + $0x10] sm:$0xff] %v1185
        %1190 = vst [vmem:[#allocation2 + $0x18] sm:$0xff] %v1186
        // Predicated region
        $region45: #{tpu_custom_call.1} parent=39 // pred_check
          %p1191 = pneg %p250
        $region46: #{tpu_custom_call.1} parent=39 // pred_check_branch
          %1193 = sbr.rel (%p1191) target = $region48
        $region47: #{tpu_custom_call.1} parent=39 // pred_region
          %v1194 = vld [vmem:[#allocation2] sm:$0xff]
          %v1195 = vld [vmem:[#allocation2 + $0x8] sm:$0xff]
          %v1196 = vld [vmem:[#allocation2 + $0x10] sm:$0xff]
          %v1197 = vld [vmem:[#allocation2 + $0x18] sm:$0xff]
          %v1198 = vrot.slane %v1194, 4
          %v1199 = vadd.f32 %v1194, %v1198
          %v1200 = vrot.slane %v1199, 2
          %v1201 = vadd.f32 %v1199, %v1200
          %v1202 = vrot.slane %v1201, 1
          %v1203 = vadd.f32 %v1201, %v1202
          %v1204 = vrot.slane %v1195, 4
          %v1205 = vadd.f32 %v1195, %v1204
          %v1206 = vrot.slane %v1205, 2
          %v1207 = vadd.f32 %v1205, %v1206
          %v1208 = vrot.slane %v1207, 1
          %v1209 = vadd.f32 %v1207, %v1208
          %v1210 = vrot.slane %v1196, 4
          %v1211 = vadd.f32 %v1196, %v1210
          %v1212 = vrot.slane %v1211, 2
          %v1213 = vadd.f32 %v1211, %v1212
          %v1214 = vrot.slane %v1213, 1
          %v1215 = vadd.f32 %v1213, %v1214
          %v1216 = vrot.slane %v1197, 4
          %v1217 = vadd.f32 %v1197, %v1216
          %v1218 = vrot.slane %v1217, 2
          %v1219 = vadd.f32 %v1217, %v1218
          %v1220 = vrot.slane %v1219, 1
          %v1221 = vadd.f32 %v1219, %v1220
          %v1222 = vld [vmem:[%s3] sm:$0xff]
          %v1223 = vld [vmem:[%s3 + $0x8] sm:$0xff]
          %v1224 = vld [vmem:[%s3 + $0x10] sm:$0xff]
          %v1225 = vld [vmem:[%s3 + $0x18] sm:$0xff]
          %v1226 = vld [vmem:[%s3 + $0x20] sm:$0xff]
          %v1227 = vld [vmem:[%s3 + $0x28] sm:$0xff]
          %v1228 = vld [vmem:[%s3 + $0x30] sm:$0xff]
          %v1229 = vld [vmem:[%s3 + $0x38] sm:$0xff]
          %v1230 = vld [vmem:[%s3 + $0x40] sm:$0xff]
          %v1231 = vld [vmem:[%s3 + $0x48] sm:$0xff]
          %v1232 = vld [vmem:[%s3 + $0x50] sm:$0xff]
          %v1233 = vld [vmem:[%s3 + $0x58] sm:$0xff]
          %v1234 = vld [vmem:[%s3 + $0x60] sm:$0xff]
          %v1235 = vld [vmem:[%s3 + $0x68] sm:$0xff]
          %v1236 = vld [vmem:[%s3 + $0x70] sm:$0xff]
          %v1237 = vld [vmem:[%s3 + $0x78] sm:$0xff]
          %v1238 = vld [vmem:[%s3 + $0x80] sm:$0xff]
          %v1239 = vld [vmem:[%s3 + $0x88] sm:$0xff]
          %v1240 = vld [vmem:[%s3 + $0x90] sm:$0xff]
          %v1241 = vld [vmem:[%s3 + $0x98] sm:$0xff]
          %v1242 = vld [vmem:[%s3 + $0xa0] sm:$0xff]
          %v1243 = vld [vmem:[%s3 + $0xa8] sm:$0xff]
          %v1244 = vld [vmem:[%s3 + $0xb0] sm:$0xff]
          %v1245 = vld [vmem:[%s3 + $0xb8] sm:$0xff]
          %v1246 = vld [vmem:[%s3 + $0xc0] sm:$0xff]
          %v1247 = vld [vmem:[%s3 + $0xc8] sm:$0xff]
          %v1248 = vld [vmem:[%s3 + $0xd0] sm:$0xff]
          %v1249 = vld [vmem:[%s3 + $0xd8] sm:$0xff]
          %v1250 = vld [vmem:[%s3 + $0xe0] sm:$0xff]
          %v1251 = vld [vmem:[%s3 + $0xe8] sm:$0xff]
          %v1252 = vld [vmem:[%s3 + $0xf0] sm:$0xff]
          %v1253 = vld [vmem:[%s3 + $0xf8] sm:$0xff]
          %v1254 = vld [vmem:[%s3 + $0x100] sm:$0xff]
          %v1255 = vld [vmem:[%s3 + $0x108] sm:$0xff]
          %v1256 = vld [vmem:[%s3 + $0x110] sm:$0xff]
          %v1257 = vld [vmem:[%s3 + $0x118] sm:$0xff]
          %v1258 = vld [vmem:[%s3 + $0x120] sm:$0xff]
          %v1259 = vld [vmem:[%s3 + $0x128] sm:$0xff]
          %v1260 = vld [vmem:[%s3 + $0x130] sm:$0xff]
          %v1261 = vld [vmem:[%s3 + $0x138] sm:$0xff]
          %v1262 = vld [vmem:[%s3 + $0x140] sm:$0xff]
          %v1263 = vld [vmem:[%s3 + $0x148] sm:$0xff]
          %v1264 = vld [vmem:[%s3 + $0x150] sm:$0xff]
          %v1265 = vld [vmem:[%s3 + $0x158] sm:$0xff]
          %v1266 = vld [vmem:[%s3 + $0x160] sm:$0xff]
          %v1267 = vld [vmem:[%s3 + $0x168] sm:$0xff]
          %v1268 = vld [vmem:[%s3 + $0x170] sm:$0xff]
          %v1269 = vld [vmem:[%s3 + $0x178] sm:$0xff]
          %v1270 = vld [vmem:[%s3 + $0x180] sm:$0xff]
          %v1271 = vld [vmem:[%s3 + $0x188] sm:$0xff]
          %v1272 = vld [vmem:[%s3 + $0x190] sm:$0xff]
          %v1273 = vld [vmem:[%s3 + $0x198] sm:$0xff]
          %v1274 = vld [vmem:[%s3 + $0x1a0] sm:$0xff]
          %v1275 = vld [vmem:[%s3 + $0x1a8] sm:$0xff]
          %v1276 = vld [vmem:[%s3 + $0x1b0] sm:$0xff]
          %v1277 = vld [vmem:[%s3 + $0x1b8] sm:$0xff]
          %v1278 = vld [vmem:[%s3 + $0x1c0] sm:$0xff]
          %v1279 = vld [vmem:[%s3 + $0x1c8] sm:$0xff]
          %v1280 = vld [vmem:[%s3 + $0x1d0] sm:$0xff]
          %v1281 = vld [vmem:[%s3 + $0x1d8] sm:$0xff]
          %v1282 = vld [vmem:[%s3 + $0x1e0] sm:$0xff]
          %v1283 = vld [vmem:[%s3 + $0x1e8] sm:$0xff]
          %v1284 = vld [vmem:[%s3 + $0x1f0] sm:$0xff]
          %v1285 = vld [vmem:[%s3 + $0x1f8] sm:$0xff]
          %v1286 = vld [vmem:[%s4] sm:$0x1]
          %1287 = vmatprep.subr.mxu0 0.0
          %1288 = vmatpush1.msra.mxu0 %v1237
          %1289 = vmatprep.subr.mxu0 0.0
          %1290 = vmatpush1.msra.mxu0 %v1236
          %1291 = vmatprep.subr.mxu0 0.0
          %1292 = vmatpush1.msra.mxu0 %v1235
          %1293 = vmatprep.subr.mxu0 0.0
          %1294 = vmatpush1.msra.mxu0 %v1234
          %1295 = vmatprep.subr.mxu0 0.0
          %1296 = vmatpush1.msra.mxu0 %v1233
          %1297 = vmatprep.subr.mxu0 0.0
          %1298 = vmatpush1.msra.mxu0 %v1232
          %1299 = vmatprep.subr.mxu0 0.0
          %1300 = vmatpush1.msra.mxu0 %v1231
          %1301 = vmatprep.subr.mxu0 0.0
          %1302 = vmatpush1.msra.mxu0 %v1230
          %1303 = vmatprep.subr.mxu0 0.0
          %1304 = vmatpush1.msra.mxu0 %v1229
          %1305 = vmatprep.subr.mxu0 0.0
          %1306 = vmatpush1.msra.mxu0 %v1228
          %1307 = vmatprep.subr.mxu0 0.0
          %1308 = vmatpush1.msra.mxu0 %v1227
          %1309 = vmatprep.subr.mxu0 0.0
          %1310 = vmatpush1.msra.mxu0 %v1226
          %1311 = vmatprep.subr.mxu0 0.0
          %1312 = vmatpush1.msra.mxu0 %v1225
          %1313 = vmatprep.subr.mxu0 0.0
          %1314 = vmatpush1.msra.mxu0 %v1224
          %1315 = vmatprep.subr.mxu0 0.0
          %1316 = vmatpush1.msra.mxu0 %v1223
          %1317 = vmatprep.subr.mxu0 0.0
          %1318 = vmatpush1.msra.mxu0 %v1222
          %1319 = vmatprep.subr.mxu0 0.0
          %1320 = vmatpush2.msra.mxu0 %v1253
          %1321 = vmatprep.subr.mxu0 0.0
          %1322 = vmatpush2.msra.mxu0 %v1252
          %1323 = vmatprep.subr.mxu0 0.0
          %1324 = vmatpush2.msra.mxu0 %v1251
          %1325 = vmatprep.subr.mxu0 0.0
          %1326 = vmatpush2.msra.mxu0 %v1250
          %1327 = vmatprep.subr.mxu0 0.0
          %1328 = vmatpush2.msra.mxu0 %v1249
          %1329 = vmatprep.subr.mxu0 0.0
          %1330 = vmatpush2.msra.mxu0 %v1248
          %1331 = vmatprep.subr.mxu0 0.0
          %1332 = vmatpush2.msra.mxu0 %v1247
          %1333 = vmatprep.subr.mxu0 0.0
          %1334 = vmatpush2.msra.mxu0 %v1246
          %1335 = vmatprep.subr.mxu0 0.0
          %1336 = vmatpush2.msra.mxu0 %v1245
          %1337 = vmatprep.subr.mxu0 0.0
          %1338 = vmatpush2.msra.mxu0 %v1244
          %1339 = vmatprep.subr.mxu0 0.0
          %1340 = vmatpush2.msra.mxu0 %v1243
          %1341 = vmatprep.subr.mxu0 0.0
          %1342 = vmatpush2.msra.mxu0 %v1242
          %1343 = vmatprep.subr.mxu0 0.0
          %1344 = vmatpush2.msra.mxu0 %v1241
          %1345 = vmatprep.subr.mxu0 0.0
          %1346 = vmatpush2.msra.mxu0 %v1240
          %1347 = vmatprep.subr.mxu0 0.0
          %1348 = vmatpush2.msra.mxu0 %v1239
          %1349 = vmatprep.subr.mxu0 0.0
          %1350 = vmatpush2.msra.mxu0 %v1238
          %1351 = vmatprep.mubr.f32.mxu0 %v1209
          %1352 = vmatmul.mubr.f32.gmra.mxu0 %v1203
          %v1353 = vpop.f32.mrf.mxu0
          %v1354 = vadd.f32 %v1286, %v1353
          %v1355 = vpop.f32.mrf.mxu0
          %1356 = vdwg.mxu0
          %1357 = vmatprep.subr.mxu0 0.0
          %1358 = vmatpush1.msra.mxu0 %v1269
          %1359 = vmatprep.subr.mxu0 0.0
          %1360 = vmatpush1.msra.mxu0 %v1268
          %1361 = vmatprep.subr.mxu0 0.0
          %1362 = vmatpush1.msra.mxu0 %v1267
          %1363 = vmatprep.subr.mxu0 0.0
          %1364 = vmatpush1.msra.mxu0 %v1266
          %1365 = vmatprep.subr.mxu0 0.0
          %1366 = vmatpush1.msra.mxu0 %v1265
          %1367 = vmatprep.subr.mxu0 0.0
          %1368 = vmatpush1.msra.mxu0 %v1264
          %1369 = vmatprep.subr.mxu0 0.0
          %1370 = vmatpush1.msra.mxu0 %v1263
          %1371 = vmatprep.subr.mxu0 0.0
          %1372 = vmatpush1.msra.mxu0 %v1262
          %1373 = vmatprep.subr.mxu0 0.0
          %1374 = vmatpush1.msra.mxu0 %v1261
          %1375 = vmatprep.subr.mxu0 0.0
          %1376 = vmatpush1.msra.mxu0 %v1260
          %1377 = vmatprep.subr.mxu0 0.0
          %1378 = vmatpush1.msra.mxu0 %v1259
          %1379 = vmatprep.subr.mxu0 0.0
          %1380 = vmatpush1.msra.mxu0 %v1258
          %1381 = vmatprep.subr.mxu0 0.0
          %1382 = vmatpush1.msra.mxu0 %v1257
          %1383 = vmatprep.subr.mxu0 0.0
          %1384 = vmatpush1.msra.mxu0 %v1256
          %1385 = vmatprep.subr.mxu0 0.0
          %1386 = vmatpush1.msra.mxu0 %v1255
          %1387 = vmatprep.subr.mxu0 0.0
          %1388 = vmatpush1.msra.mxu0 %v1254
          %1389 = vmatprep.subr.mxu0 0.0
          %1390 = vmatpush2.msra.mxu0 %v1285
          %1391 = vmatprep.subr.mxu0 0.0
          %1392 = vmatpush2.msra.mxu0 %v1284
          %1393 = vmatprep.subr.mxu0 0.0
          %1394 = vmatpush2.msra.mxu0 %v1283
          %1395 = vmatprep.subr.mxu0 0.0
          %1396 = vmatpush2.msra.mxu0 %v1282
          %1397 = vmatprep.subr.mxu0 0.0
          %1398 = vmatpush2.msra.mxu0 %v1281
          %1399 = vmatprep.subr.mxu0 0.0
          %1400 = vmatpush2.msra.mxu0 %v1280
          %1401 = vmatprep.subr.mxu0 0.0
          %1402 = vmatpush2.msra.mxu0 %v1279
          %1403 = vmatprep.subr.mxu0 0.0
          %1404 = vmatpush2.msra.mxu0 %v1278
          %1405 = vmatprep.subr.mxu0 0.0
          %1406 = vmatpush2.msra.mxu0 %v1277
          %1407 = vmatprep.subr.mxu0 0.0
          %1408 = vmatpush2.msra.mxu0 %v1276
          %1409 = vmatprep.subr.mxu0 0.0
          %1410 = vmatpush2.msra.mxu0 %v1275
          %1411 = vmatprep.subr.mxu0 0.0
          %1412 = vmatpush2.msra.mxu0 %v1274
          %1413 = vmatprep.subr.mxu0 0.0
          %1414 = vmatpush2.msra.mxu0 %v1273
          %1415 = vmatprep.subr.mxu0 0.0
          %1416 = vmatpush2.msra.mxu0 %v1272
          %1417 = vmatprep.subr.mxu0 0.0
          %1418 = vmatpush2.msra.mxu0 %v1271
          %1419 = vmatprep.subr.mxu0 0.0
          %1420 = vmatpush2.msra.mxu0 %v1270
          %1421 = vmatprep.mubr.f32.mxu0 %v1221
          %1422 = vmatmul.mubr.f32.gmra.mxu0 %v1215
          %v1423 = vpop.f32.mrf.mxu0
          %v1424 = vadd.f32 %v1354, %v1423
          %v1425 = vpop.f32.mrf.mxu0
          %1426 = vdwg.mxu0
          %1427 = vst [vmem:[%s239] sm:$0x1] %v1424
        $region48: #{tpu_custom_call.1} parent=39 // pred_fallthru
          _
        %s1428 = sand.u32 %s151, 1
        %s1429 = scalar_lea.sflag [#allocation4], %s1428
        %s1430 = sand.u32 %s151, 1
        %s1431 = scalar_lea.vmem [#allocation3], %s1430
        // Predicated region
        $region49: #{tpu_custom_call.1} parent=39 // pred_check
          %p1432 = pneg %p161
        $region50: #{tpu_custom_call.1} parent=39 // pred_check_branch
          %1434 = sbr.rel (%p1432) target = $region52
        $region51: #{tpu_custom_call.1} parent=39 // pred_region
          %s1436 = ssub.s32 16, 16
          %1437 = vsyncadd %s1429, %s1436
          %s1438 = smul.addr %s23, 16
          %s1439 = scalar_lea.hbm %s5, %s1438
          %s1441 = sshll.u32 %s1431, 4
          %s1442 = int_to_ptr.vmem [resolvable:$true] %s1441
          %1444 = dma.vmem_to_hbm [thread:$0]  %s1442, 16, %s1439, %s1429
        $region52: #{tpu_custom_call.1} parent=39 // pred_fallthru
          _
      $region40: #{tpu_custom_call.1} parent=5 // pred_fallthru
        _
      %p1445 = scmp.le.s32.totalorder 2, %s14
      // Predicated region
      $region53: #{tpu_custom_call.1} parent=5 // pred_check
        %p1446 = pneg %p1445
      $region54: #{tpu_custom_call.1} parent=5 // pred_check_branch
        %1448 = sbr.rel (%p1446) target = $region56
      $region55: #{tpu_custom_call.1} parent=5 // pred_region
        %s1449 = ssub.s32 %s14, 2
        // Predicated region
        $region57: #{tpu_custom_call.1} parent=55 // pred_check
          %p1450 = pneg %p167
        $region58: #{tpu_custom_call.1} parent=55 // pred_check_branch
          %1452 = sbr.rel (%p1450) target = $region60
        $region59: #{tpu_custom_call.1} parent=55 // pred_region
          %s1453 = sand.u32 %s152, 1
          %s1454 = scalar_lea.sflag [#allocation4], %s1453
          %s1455 = sand.u32 %s152, 1
          %s1456 = scalar_lea.vmem [#allocation3], %s1455
          %1457 = dma.done %s1454, 16
        $region60: #{tpu_custom_call.1} parent=55 // pred_fallthru
          _
      $region56: #{tpu_custom_call.1} parent=5 // pred_fallthru
        _
    $region6: #{tpu_custom_call.1} parent=1 // loop_footer
      %s18 = sadd.s32 1, %s14
    $region7: #{tpu_custom_call.1} parent=1 // loop_footer_branch
      %13 = sbr.rel target = $region3
    $region8: #{tpu_custom_call.1} parent=1 // loop_exit
      _
    %1458 = vsyncpa [#allocation4], 1
    %s1459 = scalar_lea.sflag [#allocation4], 1
    %1460 = vsyncpa %s1459, 1

</llo_original>
